<compile_context>
chip_gen: v5e
topology: v5e:2x2
jax: 0.10.0
libtpu: 0.0.40
codegen_flags: <defaults>
</compile_context>

<pallas_src>
import functools

import jax
import jax.numpy as jnp
from jax import lax
from jax.experimental import pallas as pl
from jax.experimental.pallas import tpu as pltpu


_CP = pltpu.CompilerParams(
    dimension_semantics=("parallel",),      # batch grid axis -> both TCs on v7x
    # TODO(synk): size per generation; 16 MiB is ~10x the measured working set here
    # and leaves double-buffer headroom even on v7x's 64 MiB per-TC VMEM.
    vmem_limit_bytes=16 * 1024 * 1024,
)


def _rup128(v):
    return -(-v // 128) * 128


# ----------------------------------------------------------------------------
# Attention kernels (self-attention [+ fused context flow])
# ----------------------------------------------------------------------------
def _attention_core(x_ref, wq_ref, bq_ref):
    """Query conv, energy, softmax. Returns (x, attn, attn^T in bf16)."""
    x = x_ref[0]                                               # (C, N) f32
    # proj_query = query_conv(x): 1x1 conv == channel matmul (padded rows inert).
    q = jnp.dot(wq_ref[...], x.astype(jnp.bfloat16),
                preferred_element_type=jnp.float32) + bq_ref[...]      # (Cq, N) f32
    q_bf = q.astype(jnp.bfloat16)
    qt_bf = q.T.astype(jnp.bfloat16)                           # tiny (N, Cq) transpose
    # energy[i, j] = sum_c q[c, i] * q[c, j]  -> symmetric NxN
    energy = jnp.dot(qt_bf, q_bf, preferred_element_type=jnp.float32)  # (N, N) f32
    # attn^T without any NxN transpose: energy is symmetric, so softmax along
    # axis 0 (cheap sublane reduces, (1, N) stats) IS softmax(energy, -1)^T.
    m_r = jnp.max(energy, axis=0, keepdims=True)               # (1, N)
    e_r = jnp.exp(energy - m_r)
    inv_r = pl.reciprocal(jnp.sum(e_r, axis=0, keepdims=True), approx=True)
    attn_t_bf = (e_r * inv_r).astype(jnp.bfloat16)             # == attn^T, bf16 for MXU
    # attention returned to the caller: ordinary row softmax (second exp pass lands
    # on otherwise idle EUP/VPU slots -- cheaper than the NxN XLU transpose).
    m_c = jnp.max(energy, axis=-1, keepdims=True)              # (N, 1)
    e_c = jnp.exp(energy - m_c)
    inv_c = pl.reciprocal(jnp.sum(e_c, axis=-1, keepdims=True), approx=True)
    attn = e_c * inv_c
    return x, attn, attn_t_bf


def attn_kernel(x_ref, wq_ref, bq_ref, gamma_ref, out_ref, attn_ref):
    """out = gamma * (V @ A^T) + x ; attn = softmax(Q^T Q)."""
    x, attn, attn_t_bf = _attention_core(x_ref, wq_ref, bq_ref)
    attn_ref[0] = attn.astype(attn_ref.dtype)
    o = jnp.dot(x.astype(jnp.bfloat16), attn_t_bf, preferred_element_type=jnp.float32)
    out_ref[0] = gamma_ref[0] * o + x


def attn_ctx_kernel(x_ref, wq_ref, bq_ref, pre_ref, mask_ref, gamma_ref, alpha_ref,
                    out_ref, attn_ref, cf_ref):
    """Attention + fused context flow; value/context bmms share one stacked matmul."""
    x, attn, attn_t_bf = _attention_core(x_ref, wq_ref, bq_ref)
    attn_ref[0] = attn.astype(attn_ref.dtype)
    pre = pre_ref[0]                                           # (C, N) f32
    C = x.shape[0]
    # Stack value and context operands: one (2C, N) @ (N, N) MXU pass instead of two.
    v2 = jnp.concatenate([x, pre], axis=0).astype(jnp.bfloat16)           # (2C, N)
    o2 = jnp.dot(v2, attn_t_bf, preferred_element_type=jnp.float32)       # (2C, N)
    out_ref[0] = gamma_ref[0] * o2[:C, :] + x
    m = mask_ref[0]                                            # (1, N)
    cf_ref[0] = alpha_ref[0] * (1.0 - m) * o2[C:, :] + m * pre


# ----------------------------------------------------------------------------
# Fused BatchNorm + LeakyReLU + 3x3-conv kernels (ResBlock stages)
# ----------------------------------------------------------------------------
def _bn_lrelu(x, mean, invstd, border):
    """BN normalize (identity affine at init) + LeakyReLU(0.01), zeroing the conv halo."""
    xn = (x - mean) * invstd
    h = jnp.where(xn >= 0.0, xn, 0.01 * xn)
    return h * border        # border==0 on halo/margin -> zero padding after activation


def _conv3x3_stacked(h32, w_bf_ref, *, off, Wp, Nout):
    """3x3 conv as ONE stacked matmul: in-VMEM im2col (9*Cin, Nout) @ bf16 weights.

    Slices/concat stay f32 (8-row sublane aligned), then a single bf16 cast feeds
    the MXU -- one weight load + one result drain instead of 9 tiny matmuls.
    """
    cols = []
    for t in range(9):
        start = off + (t // 3) * Wp + (t % 3)        # static per-tap window start
        cols.append(h32[:, start:start + Nout])      # (Cin, Nout) f32
    im2col = jnp.concatenate(cols, axis=0).astype(jnp.bfloat16)   # (9*Cin, Nout)
    return jnp.dot(w_bf_ref[...], im2col, preferred_element_type=jnp.float32)


def bn_conv3_kernel(x_ref, mask_in_ref, mean_ref, invstd_ref, w_ref, b_ref,
                    mask_out_ref, o_ref, *, off, Wp, Nout):
    """o = conv3x3(LReLU(BN(x))) + bias, emitted directly in the stage-2-ready
    padded layout (interior values, zero elsewhere)."""
    h = _bn_lrelu(x_ref[0], mean_ref[...], invstd_ref[...], mask_in_ref[...])
    acc = _conv3x3_stacked(h, w_ref, off=off, Wp=Wp, Nout=Nout)
    o_ref[0] = (acc + b_ref[...]) * mask_out_ref[...]


def bn_conv3_bypass_kernel(h_ref, mask_in_ref, mean_ref, invstd_ref, w_ref, b_ref,
                           xby_ref, wby_ref, bby_ref, o_ref, *, off, Wp, Nout):
    """o = conv3x3(LReLU(BN(h))) + b2 + (wby @ x_cat + bby); bypass reads a
    128-aligned (C2, Nout) slab (no lane-shifted slice)."""
    h = _bn_lrelu(h_ref[0], mean_ref[...], invstd_ref[...], mask_in_ref[...])
    acc = _conv3x3_stacked(h, w_ref, off=off, Wp=Wp, Nout=Nout)
    by = jnp.dot(wby_ref[...], xby_ref[0].astype(jnp.bfloat16),
                 preferred_element_type=jnp.float32)
    o_ref[0] = acc + by + b_ref[...] + bby_ref[...]


# ----------------------------------------------------------------------------
# JAX glue (layout prep / batch statistics)
# ----------------------------------------------------------------------------
def _to_ext(x_img, margin, width):
    """(B, C, H, W) -> (B, C, width): zero 1-pixel halo, flattened, placed at `margin`."""
    B, C, H, W = x_img.shape
    Np = (H + 2) * (W + 2)
    xp = jnp.pad(x_img, ((0, 0), (0, 0), (1, 1), (1, 1))).reshape(B, C, Np)
    return jnp.pad(xp, ((0, 0), (0, 0), (margin, width - margin - Np)))


def _interior_mask(H, W, margin, width):
    """(1, width) mask: 1 at interior image pixels of the margin layout, 0 elsewhere."""
    Hp, Wp = H + 2, W + 2
    m = jnp.zeros((Hp, Wp), jnp.float32).at[1:1 + H, 1:1 + W].set(1.0).reshape(Hp * Wp)
    return jnp.pad(m, (margin, width - margin - Hp * Wp)).reshape(1, width)


def _ext_to_image(o_ext, H, W, margin):
    """Margin layout (B, C, width) -> (B, C, H, W) (drop halo / margin columns)."""
    B, C, _ = o_ext.shape
    Hp, Wp = H + 2, W + 2
    img = o_ext[:, :, margin:margin + Hp * Wp].reshape(B, C, Hp, Wp)
    return img[:, :, 1:1 + H, 1:1 + W]


def _stack_taps(w):
    """(Cout, Cin, 3, 3) PyTorch conv weight -> (Cout, 9*Cin) bf16 stacked slab."""
    Cout, Cin = w.shape[0], w.shape[1]
    return jnp.transpose(w, (0, 2, 3, 1)).reshape(Cout, 9 * Cin).astype(jnp.bfloat16)


def _bn_stats(x_img):
    """Training-mode BN stats (biased var, eps=1e-5), two-pass mean/var for accuracy."""
    C = x_img.shape[1]
    mean = jnp.mean(x_img, axis=(0, 2, 3))
    invstd = lax.rsqrt(jnp.var(x_img, axis=(0, 2, 3)) + 1e-5)
    return mean.reshape(C, 1), invstd.reshape(C, 1)


# ----------------------------------------------------------------------------
# ResBlock (2C -> C, hidden=C, BatchNorm2d, LeakyReLU, no sampling)
# ----------------------------------------------------------------------------
def resblock_forward(x_cat, params):
    B, C2, H, W = x_cat.shape
    C = C2 // 2
    Hp, Wp = H + 2, W + 2
    Np = Hp * Wp

    # Lane-dense layout plan (all block last-dims are multiples of 128):
    #   final output : margin 0   width Nf
    #   h1 (stage-2 in): margin M2 width N2
    #   x_cat (stage-1 in): margin M1 (128-aligned) width N1
    Nf = _rup128(Np)
    M2 = Wp + 1
    N2 = _rup128(Nf + M2 + Wp)
    M1 = _rup128(M2 + Wp + 1)
    N1 = _rup128(N2 + (M1 - M2) + Wp)

    mask1 = _interior_mask(H, W, M1, N1)
    mask2 = _interior_mask(H, W, M2, N2)     # stage-1 output mask == stage-2 input mask
    x_ext = _to_ext(x_cat, M1, N1)           # stage-1 conv input
    x_by = _to_ext(x_cat, 0, Nf)             # aligned slab for the fused 1x1 bypass

    # ---- stage 1: BN(2C) + LReLU + conv1 3x3 (2C -> C), one fused kernel --------
    mean1, invstd1 = _bn_stats(x_cat)
    w1 = _stack_taps(params["w1"])           # (C, 9*C2) bf16
    h1_ext = pl.pallas_call(
        functools.partial(bn_conv3_kernel, off=M1 - M2 - Wp - 1, Wp=Wp, Nout=N2),
        out_shape=jax.ShapeDtypeStruct((B, C, N2), jnp.float32),
        grid=(B,),
        in_specs=[
            pl.BlockSpec((1, C2, N1), lambda b: (b, 0, 0)),
            pl.BlockSpec((1, N1), lambda b: (0, 0)),
            pl.BlockSpec((C2, 1), lambda b: (0, 0)),
            pl.BlockSpec((C2, 1), lambda b: (0, 0)),
            pl.BlockSpec((C, 9 * C2), lambda b: (0, 0)),
            pl.BlockSpec((C, 1), lambda b: (0, 0)),
            pl.BlockSpec((1, N2), lambda b: (0, 0)),
        ],
        out_specs=pl.BlockSpec((1, C, N2), lambda b: (b, 0, 0)),
        compiler_params=_CP,
    )(x_ext, mask1, mean1, invstd1, w1, params["b1"], mask2)

    # ---- stage 2: BN(C) + LReLU + conv2 3x3 (C -> C) + fused 1x1 bypass ---------
    # h1_ext is consumed directly (already padded-layout with zero halo); only the
    # cross-batch BN reduction stays in XLA.
    mean2, invstd2 = _bn_stats(_ext_to_image(h1_ext, H, W, M2))
    w2 = _stack_taps(params["w2"])           # (C, 9*C) bf16
    wby = params["wby"].reshape(C, C2).astype(jnp.bfloat16)
    out_ext = pl.pallas_call(
        functools.partial(bn_conv3_bypass_kernel, off=M2 - Wp - 1, Wp=Wp, Nout=Nf),
        out_shape=jax.ShapeDtypeStruct((B, C, Nf), jnp.float32),
        grid=(B,),
        in_specs=[
            pl.BlockSpec((1, C, N2), lambda b: (b, 0, 0)),
            pl.BlockSpec((1, N2), lambda b: (0, 0)),
            pl.BlockSpec((C, 1), lambda b: (0, 0)),
            pl.BlockSpec((C, 1), lambda b: (0, 0)),
            pl.BlockSpec((C, 9 * C), lambda b: (0, 0)),
            pl.BlockSpec((C, 1), lambda b: (0, 0)),
            pl.BlockSpec((1, C2, Nf), lambda b: (b, 0, 0)),
            pl.BlockSpec((C, C2), lambda b: (0, 0)),
            pl.BlockSpec((C, 1), lambda b: (0, 0)),
        ],
        out_specs=pl.BlockSpec((1, C, Nf), lambda b: (b, 0, 0)),
        compiler_params=_CP,
    )(h1_ext, mask2, mean2, invstd2, w2, params["b2"], x_by, wby, params["bby"])
    return _ext_to_image(out_ext, H, W, 0)


# ----------------------------------------------------------------------------
# Auto_Attn forward
# ----------------------------------------------------------------------------
def auto_attn_forward(x, params, pre=None, mask=None, attn_dtype=jnp.float32):
    """Equivalent of Auto_Attn.forward(x, pre, mask). Returns (out, attention).

    attn_dtype=jnp.bfloat16 halves the only O(N^2) HBM writeback when the caller
    tolerates reduced precision on the returned attention map.
    """
    B, C, H, W = x.shape
    N = H * W
    x_flat = x.reshape(B, C, N)
    wq = params["wq_pad"].astype(jnp.bfloat16)   # (Cq_pad, C); rows >= C//4 are zero
    bq = params["bq_pad"]                        # (Cq_pad, 1) f32
    Cq_pad = wq.shape[0]

    # TODO(synk): collapse grid=(B,) into a single full-batch step on single-TC
    # v5e/v6e (per-step overhead); keep the parallel batch grid for v7x megacore.
    # TODO(synk): for N >= ~1k (v7x, 64 MiB VMEM) the (1, N, N) attention tile
    # should be re-tiled flash-style (online softmax over key blocks).
    if pre is None:
        out_flat, attn = pl.pallas_call(
            attn_kernel,
            out_shape=(
                jax.ShapeDtypeStruct((B, C, N), jnp.float32),
                jax.ShapeDtypeStruct((B, N, N), attn_dtype),
            ),
            grid=(B,),
            in_specs=[
                pl.BlockSpec((1, C, N), lambda b: (b, 0, 0)),
                pl.BlockSpec((Cq_pad, C), lambda b: (0, 0)),
                pl.BlockSpec((Cq_pad, 1), lambda b: (0, 0)),
                pl.BlockSpec(memory_space=pltpu.MemorySpace.SMEM),
            ],
            out_specs=(
                pl.BlockSpec((1, C, N), lambda b: (b, 0, 0)),
                pl.BlockSpec((1, N, N), lambda b: (b, 0, 0)),
            ),
            compiler_params=_CP,
        )(x_flat, wq, bq, params["gamma"])
        return out_flat.reshape(B, C, H, W), attn

    # pre/mask path: attention + context flow fused in a single kernel.
    pre_flat = pre.reshape(B, C, N)
    mask_flat = mask.reshape(B, 1, N)
    out_flat, attn, cf_flat = pl.pallas_call(
        attn_ctx_kernel,
        out_shape=(
            jax.ShapeDtypeStruct((B, C, N), jnp.float32),
            jax.ShapeDtypeStruct((B, N, N), attn_dtype),
            jax.ShapeDtypeStruct((B, C, N), jnp.float32),
        ),
        grid=(B,),
        in_specs=[
            pl.BlockSpec((1, C, N), lambda b: (b, 0, 0)),
            pl.BlockSpec((Cq_pad, C), lambda b: (0, 0)),
            pl.BlockSpec((Cq_pad, 1), lambda b: (0, 0)),
            pl.BlockSpec((1, C, N), lambda b: (b, 0, 0)),
            pl.BlockSpec((1, 1, N), lambda b: (b, 0, 0)),
            pl.BlockSpec(memory_space=pltpu.MemorySpace.SMEM),
            pl.BlockSpec(memory_space=pltpu.MemorySpace.SMEM),
        ],
        out_specs=(
            pl.BlockSpec((1, C, N), lambda b: (b, 0, 0)),
            pl.BlockSpec((1, N, N), lambda b: (b, 0, 0)),
            pl.BlockSpec((1, C, N), lambda b: (b, 0, 0)),
        ),
        compiler_params=_CP,
    )(x_flat, wq, bq, pre_flat, mask_flat, params["gamma"], params["alpha"])

    out = out_flat.reshape(B, C, H, W)
    context_flow = cf_flat.reshape(B, C, H, W)
    out = resblock_forward(jnp.concatenate([out, context_flow], axis=1), params)
    return out, attn


# ----------------------------------------------------------------------------
# Deterministic parameter setup (glue)
# ----------------------------------------------------------------------------
def _spectral_normalize(w, key):
    # TODO(synk): torch SpectralNorm keeps persistent power-iteration state (u);
    # here we do a single power iteration from a fresh random u at init time.
    wm = w.reshape(w.shape[0], -1)
    u = jax.random.normal(key, (wm.shape[0],), jnp.float32)
    u = u / (jnp.linalg.norm(u) + 1e-12)
    v = wm.T @ u
    v = v / (jnp.linalg.norm(v) + 1e-12)
    u = wm @ v
    u = u / (jnp.linalg.norm(u) + 1e-12)
    sigma = u @ wm @ v
    return w / sigma


def init_params(key, C):
    Cq = C // 4
    Cq_pad = max(Cq, 8)            # pad query channels to a sublane multiple;
    C2 = 2 * C                     # padded rows are zero -> identical energy.
    ks = jax.random.split(key, 12)

    def w(k, shape, scale=0.1):
        return scale * jax.random.normal(k, shape, jnp.float32)

    wq = w(ks[0], (Cq, C))
    bq = w(ks[1], (Cq, 1))
    wq_pad = jnp.zeros((Cq_pad, C), jnp.float32).at[:Cq].set(wq)
    bq_pad = jnp.zeros((Cq_pad, 1), jnp.float32).at[:Cq].set(bq)

    return {
        "wq_pad": wq_pad,
        "bq_pad": bq_pad,
        # __init__ uses zeros for gamma/alpha; nonzero here to exercise the path.
        "gamma": jnp.array([0.5], jnp.float32),
        "alpha": jnp.array([0.3], jnp.float32),
        # ResBlock(2C -> C): conv1 3x3, conv2 3x3, bypass 1x1 (all spectral-normed).
        "w1": _spectral_normalize(w(ks[2], (C, C2, 3, 3)), ks[3]),
        "b1": w(ks[4], (C, 1)),
        "w2": _spectral_normalize(w(ks[5], (C, C, 3, 3)), ks[6]),
        "b2": w(ks[7], (C, 1)),
        "wby": _spectral_normalize(w(ks[8], (C, C2, 1, 1)), ks[9]),
        "bby": w(ks[10], (C, 1)),
        # BatchNorm affine params are identity at fresh init (weight=1, bias=0).
    }


# ----------------------------------------------------------------------------
if __name__ == "__main__":
    key = jax.random.PRNGKey(0)
    B, C, H, W = 2, 8, 16, 16
    kx, kp, kparam = jax.random.split(key, 3)

    x = jax.random.normal(kx, (B, C, H, W), jnp.float32)
    pre = jax.random.normal(kp, (B, C, H, W), jnp.float32)
    # binary mask, broadcast over channels (left half = 1, right half = 0)
    mask = (lax.broadcasted_iota(jnp.int32, (B, 1, H, W), 3) < (W // 2)).astype(jnp.float32)

    params = init_params(kparam, C)

    # pre=None path (out = gamma*attn_out + x)
    out0, attn0 = auto_attn_forward(x, params)
    jax.block_until_ready((out0, attn0))
    assert out0.shape == (B, C, H, W) and attn0.shape == (B, H * W, H * W)
    assert bool(jnp.isfinite(out0).all()) and bool(jnp.isfinite(attn0).all())

    # pre/mask path (fused context flow + fused ResBlock)
    out1, attn1 = auto_attn_forward(x, params, pre=pre, mask=mask)
    jax.block_until_ready((out1, attn1))
    assert out1.shape == (B, C, H, W) and attn1.shape == (B, H * W, H * W)
    assert bool(jnp.isfinite(out1).all()) and bool(jnp.isfinite(attn1).all())

    print("KERNEL_OK")
</pallas_src>

<mosaic_0001>
module attributes {stable_mosaic.version = 11 : i64} {
  func.func @attn_kernel(%arg0: i32, %arg1: memref<1x8x256xf32, #tpu.memory_space<vmem>>, %arg2: memref<8x8xbf16, #tpu.memory_space<vmem>>, %arg3: memref<8x1xf32, #tpu.memory_space<vmem>>, %arg4: memref<1xf32, #tpu.memory_space<smem>>, %arg5: memref<1x8x256xf32, #tpu.memory_space<vmem>>, %arg6: memref<1x256x256xf32, #tpu.memory_space<vmem>>) attributes {dimension_semantics = [#tpu.dimension_semantics<parallel>], iteration_bounds = array<i64: 2>, scalar_prefetch = 0 : i64, scratch_operands = 0 : i64, tpu.core_type = #tpu.core_type<tc>, window_params = [{transform_indices = @transform_0, window_bounds = array<i64: 1, 8, 256>}, {pipeline_mode = #tpu.pipeline_mode<synchronous>, transform_indices = @transform_1, window_bounds = array<i64: 8, 8>}, {pipeline_mode = #tpu.pipeline_mode<synchronous>, transform_indices = @transform_2, window_bounds = array<i64: 8, 1>}, {transform_indices = @transform_3, window_bounds = array<i64: 1>}, {transform_indices = @transform_4, window_bounds = array<i64: 1, 8, 256>}, {transform_indices = @transform_5, window_bounds = array<i64: 1, 256, 256>}]} {
    %c0 = arith.constant 0 : index
    %c0_0 = arith.constant 0 : index
    %c0_1 = arith.constant 0 : index
    %0 = vector.load %arg1[%c0, %c0_0, %c0_1] : memref<1x8x256xf32, #tpu.memory_space<vmem>>, vector<1x8x256xf32>
    %1 = vector.shape_cast %0 : vector<1x8x256xf32> to vector<8x256xf32>
    %c0_2 = arith.constant 0 : index
    %c0_3 = arith.constant 0 : index
    %2 = vector.load %arg2[%c0_2, %c0_3] : memref<8x8xbf16, #tpu.memory_space<vmem>>, vector<8x8xbf16>
    %3 = arith.truncf %1 : vector<8x256xf32> to vector<8x256xbf16>
    %cst = arith.constant dense<0.000000e+00> : vector<8x256xf32>
    %4 = tpu.matmul %2, %3, %cst {dimension_numbers = #tpu.dot_dimension_numbers<[1], [0], [0], [1], [0, 0, 1, 1], [], []>} : vector<8x8xbf16>, vector<8x256xbf16>, vector<8x256xf32> -> vector<8x256xf32>
    %c0_4 = arith.constant 0 : index
    %c0_5 = arith.constant 0 : index
    %5 = vector.load %arg3[%c0_4, %c0_5] : memref<8x1xf32, #tpu.memory_space<vmem>>, vector<8x1xf32>
    %6 = vector.broadcast %5 : vector<8x1xf32> to vector<8x256xf32>
    %7 = arith.addf %4, %6 : vector<8x256xf32>
    %8 = arith.truncf %7 : vector<8x256xf32> to vector<8x256xbf16>
    %9 = tpu.transpose %7, [1, 0] : vector<8x256xf32> -> vector<256x8xf32>
    %10 = arith.truncf %9 : vector<256x8xf32> to vector<256x8xbf16>
    %cst_6 = arith.constant dense<0.000000e+00> : vector<256x256xf32>
    %11 = tpu.matmul %10, %8, %cst_6 {dimension_numbers = #tpu.dot_dimension_numbers<[1], [0], [0], [1], [0, 0, 1, 1], [], []>} : vector<256x8xbf16>, vector<8x256xbf16>, vector<256x256xf32> -> vector<256x256xf32>
    %cst_7 = arith.constant dense<0xFF800000> : vector<256xf32>
    %12 = vector.multi_reduction <maximumf>, %11, %cst_7 [0] : vector<256x256xf32> to vector<256xf32>
    %13 = vector.shape_cast %12 : vector<256xf32> to vector<1x256xf32>
    %14 = vector.broadcast %13 : vector<1x256xf32> to vector<256x256xf32>
    %15 = arith.subf %11, %14 : vector<256x256xf32>
    %16 = math.exp %15 : vector<256x256xf32>
    %cst_8 = arith.constant dense<0.000000e+00> : vector<256xf32>
    %17 = vector.multi_reduction <add>, %16, %cst_8 [0] : vector<256x256xf32> to vector<256xf32>
    %18 = vector.shape_cast %17 : vector<256xf32> to vector<1x256xf32>
    %19 = tpu.reciprocal %18 {approx = true} : vector<1x256xf32> -> vector<1x256xf32>
    %20 = vector.broadcast %19 : vector<1x256xf32> to vector<256x256xf32>
    %21 = arith.mulf %16, %20 : vector<256x256xf32>
    %22 = arith.truncf %21 : vector<256x256xf32> to vector<256x256xbf16>
    %cst_9 = arith.constant dense<0xFF800000> : vector<256xf32>
    %23 = vector.multi_reduction <maximumf>, %11, %cst_9 [1] : vector<256x256xf32> to vector<256xf32>
    %24 = vector.shape_cast %23 : vector<256xf32> to vector<256x1xf32>
    %25 = vector.broadcast %24 : vector<256x1xf32> to vector<256x256xf32>
    %26 = arith.subf %11, %25 : vector<256x256xf32>
    %27 = math.exp %26 : vector<256x256xf32>
    %cst_10 = arith.constant dense<0.000000e+00> : vector<256xf32>
    %28 = vector.multi_reduction <add>, %27, %cst_10 [1] : vector<256x256xf32> to vector<256xf32>
    %29 = vector.shape_cast %28 : vector<256xf32> to vector<256x1xf32>
    %30 = tpu.reciprocal %29 {approx = true} : vector<256x1xf32> -> vector<256x1xf32>
    %31 = vector.broadcast %30 : vector<256x1xf32> to vector<256x256xf32>
    %32 = arith.mulf %27, %31 : vector<256x256xf32>
    %c0_11 = arith.constant 0 : index
    %c0_12 = arith.constant 0 : index
    %c0_13 = arith.constant 0 : index
    %33 = vector.load %arg6[%c0_11, %c0_12, %c0_13] : memref<1x256x256xf32, #tpu.memory_space<vmem>>, vector<1x256x256xf32>
    %34 = vector.shape_cast %33 : vector<1x256x256xf32> to vector<256x256xf32>
    %35 = vector.shape_cast %32 : vector<256x256xf32> to vector<1x256x256xf32>
    tpu.vector_store %arg6[%c0_11, %c0_12, %c0_13], %35 {strides = array<i32>} : memref<1x256x256xf32, #tpu.memory_space<vmem>>, vector<1x256x256xf32>,
    %36 = arith.truncf %1 : vector<8x256xf32> to vector<8x256xbf16>
    %cst_14 = arith.constant dense<0.000000e+00> : vector<8x256xf32>
    %37 = tpu.matmul %36, %22, %cst_14 {dimension_numbers = #tpu.dot_dimension_numbers<[1], [0], [0], [1], [0, 0, 1, 1], [], []>} : vector<8x256xbf16>, vector<256x256xbf16>, vector<8x256xf32> -> vector<8x256xf32>
    %c0_15 = arith.constant 0 : index
    %38 = memref.load %arg4[%c0_15] : memref<1xf32, #tpu.memory_space<smem>>
    %39 = vector.broadcast %38 : f32 to vector<8x256xf32>
    %40 = arith.mulf %39, %37 : vector<8x256xf32>
    %41 = arith.addf %40, %1 : vector<8x256xf32>
    %c0_16 = arith.constant 0 : index
    %c0_17 = arith.constant 0 : index
    %c0_18 = arith.constant 0 : index
    %42 = vector.load %arg5[%c0_16, %c0_17, %c0_18] : memref<1x8x256xf32, #tpu.memory_space<vmem>>, vector<1x8x256xf32>
    %43 = vector.shape_cast %42 : vector<1x8x256xf32> to vector<8x256xf32>
    %44 = vector.shape_cast %41 : vector<8x256xf32> to vector<1x8x256xf32>
    tpu.vector_store %arg5[%c0_16, %c0_17, %c0_18], %44 {strides = array<i32>} : memref<1x8x256xf32, #tpu.memory_space<vmem>>, vector<1x8x256xf32>,
    return
  }
  func.func @transform_0(%arg0: i32) -> (i32, i32, i32) {
    %c0_i32 = arith.constant 0 : i32
    %c0_i32_0 = arith.constant 0 : i32
    %c0_i32_1 = arith.constant 0 : i32
    return %arg0, %c0_i32, %c0_i32_0 : i32, i32, i32
  }
  func.func @transform_1(%arg0: i32) -> (i32, i32) {
    %c0_i32 = arith.constant 0 : i32
    %c0_i32_0 = arith.constant 0 : i32
    %c0_i32_1 = arith.constant 0 : i32
    return %c0_i32, %c0_i32_0 : i32, i32
  }
  func.func @transform_2(%arg0: i32) -> (i32, i32) {
    %c0_i32 = arith.constant 0 : i32
    %c0_i32_0 = arith.constant 0 : i32
    %c0_i32_1 = arith.constant 0 : i32
    return %c0_i32, %c0_i32_0 : i32, i32
  }
  func.func @transform_3(%arg0: i32) -> i32 {
    %c0_i32 = arith.constant 0 : i32
    %c0_i32_0 = arith.constant 0 : i32
    return %c0_i32 : i32
  }
  func.func @transform_4(%arg0: i32) -> (i32, i32, i32) {
    %c0_i32 = arith.constant 0 : i32
    %c0_i32_0 = arith.constant 0 : i32
    %c0_i32_1 = arith.constant 0 : i32
    return %arg0, %c0_i32, %c0_i32_0 : i32, i32, i32
  }
  func.func @transform_5(%arg0: i32) -> (i32, i32, i32) {
    %c0_i32 = arith.constant 0 : i32
    %c0_i32_0 = arith.constant 0 : i32
    %c0_i32_1 = arith.constant 0 : i32
    return %arg0, %c0_i32, %c0_i32_0 : i32, i32, i32
  }
}

</mosaic_0001>

<llo_original>
// kernel: tpu_custom_call.1
$region0: #{tpu_custom_call.1}
  #allocation0 [shape = 'u32[]', space=smem, size = 0x4, offset = 0x4, fixed_abs, tag = 'smem constant byte address 0x4 - core index']
  #allocation1 [shape = 'u32[72,128]{1,0:T(1,128)}', space=vmem, size = 0x9000, scoped, tag = 'internal scratch']
  #allocation2 [shape = 'f32[1]{0:T(128)S(6)}', space=smem, size = 0x200, scoped, tag = 'scoped memory for tpu_custom_call.1']
  %s0 = inlined_call_operand.hbm [shape: f32[2,8,256], index: 0, kind: input, shape index: {}]
  %s1 = inlined_call_operand.vmem [shape: bf16[8,8], index: 1, kind: input, shape index: {}]
  %s2 = inlined_call_operand.vmem [shape: f32[8,1], index: 2, kind: input, shape index: {}]
  %s3 = inlined_call_operand.<no memory space> [shape: f32[1], index: 3, kind: input, shape index: {}]
  %s4 = inlined_call_operand.hbm [shape: f32[2,8,256], index: 4, kind: output, shape index: {0}]
  %s5 = inlined_call_operand.hbm [shape: f32[2,256,256], index: 5, kind: output, shape index: {1}]
  %6 = xla_tuple %s4, %s5
  %s7 = sld [smem:[#allocation0]]
  $region61: #{tpu_custom_call.1} parent=0
    _
  %s9 = ssub.s32 1, %s7
  %s10 = scalar_select 0, %s9, %s7
  %11 = sst [smem:[#allocation2]] %s3
  $region1: #{tpu_custom_call.1} parent=0
    #allocation3 [shape = 'u8[16384]{0}', space=vmem, size = 0x4000, scoped, tag = 'input window, operand 0']
    #allocation4 [shape = 's32[2]{0}', space=sflag, size = 0x8, scoped, tag = 'scoped memory for tpu_custom_call.1']
    #allocation5 [shape = 's32[2]{0}', space=sflag, size = 0x8, scoped, tag = 'scoped memory for tpu_custom_call.1']
    #allocation6 [shape = 'u8[16384]{0}', space=vmem, size = 0x4000, scoped, tag = 'output window, operand 0']
    #allocation7 [shape = 'u8[524288]{0}', space=vmem, size = 0x80000, scoped, tag = 'output window, operand 1']
    #allocation8 [shape = 's32[2]{0}', space=sflag, size = 0x8, scoped, tag = 'scoped memory for tpu_custom_call.1']
    %12 = vsyncpa [#allocation4], 0
    %s13 = scalar_lea.sflag [#allocation4], 1
    %14 = vsyncpa %s13, 0
    %15 = vsyncpa [#allocation5], 0
    %s16 = scalar_lea.sflag [#allocation5], 1
    %17 = vsyncpa %s16, 0
    %18 = vsyncpa [#allocation8], 0
    %s19 = scalar_lea.sflag [#allocation8], 1
    %20 = vsyncpa %s19, 0
    loop: start=0, step=1, limit=4
    $region2: #{tpu_custom_call.1} parent=1 // loop_pre_header
      _
    $region3: #{tpu_custom_call.1} parent=1 // loop_header
      %s22 = sphi 0, %s26
      %p23 = scmp.ge.s32.totalorder %s22, 4
      %s32 = sphi 0, %s34
      %s35 = sphi 0, %s32
      %s36 = sphi 0, %s35
      %s52 = sphi 0, %s36
      %s56 = sphi 0, %s56
      %s58 = sphi 0, %s56
      %s59 = sphi 0, %s58
      %s73 = sphi 0, %s59
      %s77 = sphi 0, %s77
      %s79 = sphi 0, %s77
      %s80 = sphi 0, %s79
      %s94 = sphi 0, %s80
      %s98 = sphi 0, %s98
      %s100 = sphi 0, %s98
      %s101 = sphi 0, %s100
      %s115 = sphi 0, %s101
      %s121 = sphi 0, %s123
      %s124 = sphi 0, %s121
      %s125 = sphi 0, %s124
      %s141 = sphi 0, %s125
      %s147 = sphi 0, %s149
      %s150 = sphi 0, %s147
      %s151 = sphi 0, %s150
      %s167 = sphi 0, %s151
    $region4: #{tpu_custom_call.1} parent=1 // loop_header_branch
      %25 = sbr.rel (%p23) target = $region8
    $region5: #{tpu_custom_call.1} parent=1 // loop_body
      %s27 = ssub.s32 %s22, 1
      %s28 = ssub.s32 %s22, 2
      %s29 = sadd.s32 %s22, 1
      %s30 = ssub.s32 %s22, %s29
      %p31 = scmp.eq.s32.totalorder %s30, 0
      %s33 = sadd.s32 %s32, 1
      %s34 = scalar_select %p31, %s32, %s33
      %p37 = pneg %p31
      %p38 = scmp.eq.s32.totalorder %s22, 1
      %p39 = por %p37, %p38
      %p40 = scmp.ne.s32.totalorder %s32, %s35
      %p41 = scmp.eq.s32.totalorder %s22, 0
      %p42 = por %p40, %p41
      %p43 = scmp.ne.s32.totalorder %s32, %s35
      %p44 = scmp.eq.s32.totalorder %s27, 1
      %p45 = por %p43, %p44
      %p46 = scmp.ne.s32.totalorder %s35, %s36
      %p47 = scmp.eq.s32.totalorder %s27, 0
      %p48 = por %p46, %p47
      %p49 = scmp.ne.s32.totalorder %s35, %s36
      %p50 = scmp.eq.s32.totalorder %s28, 1
      %p51 = por %p49, %p50
      %p53 = scmp.ne.s32.totalorder %s36, %s52
      %p54 = scmp.eq.s32.totalorder %s28, 0
      %p55 = por %p53, %p54
      %s57 = sadd.s32 %s56, 1
      %p60 = scmp.eq.s32.totalorder %s22, 1
      %p61 = scmp.ne.s32.totalorder %s56, %s58
      %p62 = scmp.eq.s32.totalorder %s22, 0
      %p63 = por %p61, %p62
      %p64 = scmp.ne.s32.totalorder %s56, %s58
      %p65 = scmp.eq.s32.totalorder %s27, 1
      %p66 = por %p64, %p65
      %p67 = scmp.ne.s32.totalorder %s58, %s59
      %p68 = scmp.eq.s32.totalorder %s27, 0
      %p69 = por %p67, %p68
      %p70 = scmp.ne.s32.totalorder %s58, %s59
      %p71 = scmp.eq.s32.totalorder %s28, 1
      %p72 = por %p70, %p71
      %p74 = scmp.ne.s32.totalorder %s59, %s73
      %p75 = scmp.eq.s32.totalorder %s28, 0
      %p76 = por %p74, %p75
      %s78 = sadd.s32 %s77, 1
      %p81 = scmp.eq.s32.totalorder %s22, 1
      %p82 = scmp.ne.s32.totalorder %s77, %s79
      %p83 = scmp.eq.s32.totalorder %s22, 0
      %p84 = por %p82, %p83
      %p85 = scmp.ne.s32.totalorder %s77, %s79
      %p86 = scmp.eq.s32.totalorder %s27, 1
      %p87 = por %p85, %p86
      %p88 = scmp.ne.s32.totalorder %s79, %s80
      %p89 = scmp.eq.s32.totalorder %s27, 0
      %p90 = por %p88, %p89
      %p91 = scmp.ne.s32.totalorder %s79, %s80
      %p92 = scmp.eq.s32.totalorder %s28, 1
      %p93 = por %p91, %p92
      %p95 = scmp.ne.s32.totalorder %s80, %s94
      %p96 = scmp.eq.s32.totalorder %s28, 0
      %p97 = por %p95, %p96
      %s99 = sadd.s32 %s98, 1
      %p102 = scmp.eq.s32.totalorder %s22, 1
      %p103 = scmp.ne.s32.totalorder %s98, %s100
      %p104 = scmp.eq.s32.totalorder %s22, 0
      %p105 = por %p103, %p104
      %p106 = scmp.ne.s32.totalorder %s98, %s100
      %p107 = scmp.eq.s32.totalorder %s27, 1
      %p108 = por %p106, %p107
      %p109 = scmp.ne.s32.totalorder %s100, %s101
      %p110 = scmp.eq.s32.totalorder %s27, 0
      %p111 = por %p109, %p110
      %p112 = scmp.ne.s32.totalorder %s100, %s101
      %p113 = scmp.eq.s32.totalorder %s28, 1
      %p114 = por %p112, %p113
      %p116 = scmp.ne.s32.totalorder %s101, %s115
      %p117 = scmp.eq.s32.totalorder %s28, 0
      %p118 = por %p116, %p117
      %s119 = ssub.s32 %s22, %s29
      %p120 = scmp.eq.s32.totalorder %s119, 0
      %s122 = sadd.s32 %s121, 1
      %s123 = scalar_select %p120, %s121, %s122
      %p126 = pneg %p120
      %p127 = scmp.eq.s32.totalorder %s22, 1
      %p128 = por %p126, %p127
      %p129 = scmp.ne.s32.totalorder %s121, %s124
      %p130 = scmp.eq.s32.totalorder %s22, 0
      %p131 = por %p129, %p130
      %p132 = scmp.ne.s32.totalorder %s121, %s124
      %p133 = scmp.eq.s32.totalorder %s27, 1
      %p134 = por %p132, %p133
      %p135 = scmp.ne.s32.totalorder %s124, %s125
      %p136 = scmp.eq.s32.totalorder %s27, 0
      %p137 = por %p135, %p136
      %p138 = scmp.ne.s32.totalorder %s124, %s125
      %p139 = scmp.eq.s32.totalorder %s28, 1
      %p140 = por %p138, %p139
      %p142 = scmp.ne.s32.totalorder %s125, %s141
      %p143 = scmp.eq.s32.totalorder %s28, 0
      %p144 = por %p142, %p143
      %s145 = ssub.s32 %s22, %s29
      %p146 = scmp.eq.s32.totalorder %s145, 0
      %s148 = sadd.s32 %s147, 1
      %s149 = scalar_select %p146, %s147, %s148
      %p152 = pneg %p146
      %p153 = scmp.eq.s32.totalorder %s22, 1
      %p154 = por %p152, %p153
      %p155 = scmp.ne.s32.totalorder %s147, %s150
      %p156 = scmp.eq.s32.totalorder %s22, 0
      %p157 = por %p155, %p156
      %p158 = scmp.ne.s32.totalorder %s147, %s150
      %p159 = scmp.eq.s32.totalorder %s27, 1
      %p160 = por %p158, %p159
      %p161 = scmp.ne.s32.totalorder %s150, %s151
      %p162 = scmp.eq.s32.totalorder %s27, 0
      %p163 = por %p161, %p162
      %p164 = scmp.ne.s32.totalorder %s150, %s151
      %p165 = scmp.eq.s32.totalorder %s28, 1
      %p166 = por %p164, %p165
      %p168 = scmp.ne.s32.totalorder %s151, %s167
      %p169 = scmp.eq.s32.totalorder %s28, 0
      %p170 = por %p168, %p169
      %p171 = scmp.le.s32.totalorder 1, %s22
      %p172 = scmp.lt.s32.totalorder %s22, 3
      %p173 = pnand %p171, %p172
      %p174 = pneg %p173
      // Predicated region
      $region9: #{tpu_custom_call.1} parent=5 // pred_check
        _
      $region10: #{tpu_custom_call.1} parent=5 // pred_check_branch
        %176 = sbr.rel (%p173) target = $region12
      $region11: #{tpu_custom_call.1} parent=5 // pred_region
        %s177 = ssub.s32 %s22, 1
        // Predicated region
        $region13: #{tpu_custom_call.1} parent=11 // pred_check
          %p178 = pneg %p69
        $region14: #{tpu_custom_call.1} parent=11 // pred_check_branch
          %180 = sbr.rel (%p178) target = $region16
        $region15: #{tpu_custom_call.1} parent=11 // pred_region
          _
        $region16: #{tpu_custom_call.1} parent=11 // pred_fallthru
          _
        // Predicated region
        $region17: #{tpu_custom_call.1} parent=11 // pred_check
          %p181 = pneg %p90
        $region18: #{tpu_custom_call.1} parent=11 // pred_check_branch
          %183 = sbr.rel (%p181) target = $region20
        $region19: #{tpu_custom_call.1} parent=11 // pred_region
          _
        $region20: #{tpu_custom_call.1} parent=11 // pred_fallthru
          _
        // Predicated region
        $region21: #{tpu_custom_call.1} parent=11 // pred_check
          %p184 = pneg %p111
        $region22: #{tpu_custom_call.1} parent=11 // pred_check_branch
          %186 = sbr.rel (%p184) target = $region24
        $region23: #{tpu_custom_call.1} parent=11 // pred_region
          _
        $region24: #{tpu_custom_call.1} parent=11 // pred_fallthru
          _
      $region12: #{tpu_custom_call.1} parent=5 // pred_fallthru
        _
      %p187 = scmp.lt.s32.totalorder %s22, 2
      // Predicated region
      $region25: #{tpu_custom_call.1} parent=5 // pred_check
        %p188 = pneg %p187
      $region26: #{tpu_custom_call.1} parent=5 // pred_check_branch
        %190 = sbr.rel (%p188) target = $region28
      $region27: #{tpu_custom_call.1} parent=5 // pred_region
        // Predicated region
        $region29: #{tpu_custom_call.1} parent=27 // pred_check
          %p191 = pneg %p42
        $region30: #{tpu_custom_call.1} parent=27 // pred_check_branch
          %193 = sbr.rel (%p191) target = $region32
        $region31: #{tpu_custom_call.1} parent=27 // pred_region
          %s194 = sand.u32 %s32, 1
          %s195 = scalar_lea.sflag [#allocation4], %s194
          %s196 = sand.u32 %s32, 1
          %s197 = smul.addr %s196, 16
          %s198 = scalar_lea.vmem [#allocation3], %s197
          %200 = vsyncadd %s195, 0
          %s201 = smul.addr %s22, 2
          %s202 = smul.addr %s201, 8
          %s203 = scalar_lea.hbm %s0, %s202
          %s205 = sshll.u32 %s203, 4
          %s206 = int_to_ptr.hbm [resolvable:$true] %s205
          %s207 = sshll.u32 %s198, 4
          %s208 = int_to_ptr.vmem [resolvable:$true] %s207
          %210 = dma.hbm_to_vmem [thread:$0]  %s206, 256, %s208, %s195
        $region32: #{tpu_custom_call.1} parent=27 // pred_fallthru
          _
      $region28: #{tpu_custom_call.1} parent=5 // pred_fallthru
        _
      %p211 = scmp.le.s32.totalorder 1, %s22
      %p212 = scmp.lt.s32.totalorder %s22, 3
      %p213 = pnand %p211, %p212
      %p214 = pneg %p213
      // Predicated region
      $region33: #{tpu_custom_call.1} parent=5 // pred_check
        _
      $region34: #{tpu_custom_call.1} parent=5 // pred_check_branch
        %216 = sbr.rel (%p213) target = $region36
      $region35: #{tpu_custom_call.1} parent=5 // pred_region
        %s217 = ssub.s32 %s22, 1
        %s218 = sand.u32 %s35, 1
        %s219 = scalar_lea.sflag [#allocation4], %s218
        %s220 = sand.u32 %s35, 1
        %s221 = smul.addr %s220, 16
        %s222 = scalar_lea.vmem [#allocation3], %s221
        // Predicated region
        $region37: #{tpu_custom_call.1} parent=35 // pred_check
          %p223 = pneg %p48
        $region38: #{tpu_custom_call.1} parent=35 // pred_check_branch
          %225 = sbr.rel (%p223) target = $region40
        $region39: #{tpu_custom_call.1} parent=35 // pred_region
          %227 = dma.done %s219, 256
        $region40: #{tpu_custom_call.1} parent=35 // pred_fallthru
          _
        %s228 = sand.u32 %s35, 1
        %s229 = scalar_lea.sflag [#allocation4], %s228
        %s230 = sand.u32 %s35, 1
        %s231 = smul.addr %s230, 16
        %s232 = scalar_lea.vmem [#allocation3], %s231
        %p233 = pneg %p48
        %p234 = pneg %p45
        %p235 = pneg %p69
        %p236 = pneg %p66
        %p237 = pneg %p90
        %p238 = pneg %p87
        %p239 = pneg %p111
        %p240 = pneg %p108
        %p241 = pneg %p137
        %p242 = pneg %p134
        %s243 = sand.u32 %s124, 1
        %s244 = scalar_lea.sflag [#allocation5], %s243
        %s245 = sand.u32 %s124, 1
        %s246 = smul.addr %s245, 16
        %s247 = scalar_lea.vmem [#allocation6], %s246
        %p248 = pneg %p163
        %p249 = pneg %p160
        %s250 = sand.u32 %s150, 1
        %s251 = scalar_lea.sflag [#allocation8], %s250
        %s252 = sand.u32 %s150, 1
        %s253 = smul.addr %s252, 512
        %s254 = scalar_lea.vmem [#allocation7], %s253
        %v256 = vld [vmem:[%s222] sm:$0xff]
        %v257 = vld [vmem:[%s222 + $0x8] sm:$0xff]
        %v258 = vld [vmem:[%s1] sm:$0xf]
        %v259 = vpack.c.bf16 %v256, %v256
        %v260 = vpack.c.bf16 %v257, %v257
        %v261 = vld [vmem:[%s2] sm:$0xff]
        %263 = vset.pattern.permute.xlu0 0
        %264 = vperm.xlu0 %263, %v261
        %v265 = vpop.permute.xlu0 %264
        %vm267 = vcmask 64512
        %v269 = vsel %vm267, %v258, 0
        %vm271 = vcmask 1043456
        %v273 = vsel %vm271, %v259, 0
        %v276 = vsel %vm271, %v260, 0
        %278 = vmatpush.bf16.msra.mxu0 0
        %279 = vmatpush.bf16.msra.mxu0 0
        %280 = vmatpush.bf16.msra.mxu0 0
        %281 = vmatpush.bf16.msra.mxu0 0
        %282 = vmatpush.bf16.msra.mxu0 0
        %283 = vmatpush.bf16.msra.mxu0 0
        %284 = vmatpush.bf16.msra.mxu0 0
        %285 = vmatpush.bf16.msra.mxu0 %v273
        %286 = vmatmul.bf16.gmra.mxu0 %v269
        %v287 = vpop.f32.mrf.mxu0
        %v288 = vadd.f32 %v265, %v287
        %v289 = vpop.f32.mrf.mxu0
        %290 = vdwg.mxu0
        %291 = vmatpush.bf16.msra.mxu0 0
        %292 = vmatpush.bf16.msra.mxu0 0
        %293 = vmatpush.bf16.msra.mxu0 0
        %294 = vmatpush.bf16.msra.mxu0 0
        %295 = vmatpush.bf16.msra.mxu0 0
        %296 = vmatpush.bf16.msra.mxu0 0
        %297 = vmatpush.bf16.msra.mxu0 0
        %298 = vmatpush.bf16.msra.mxu0 %v276
        %299 = vmatmul.bf16.gmra.mxu0 %v269
        %v300 = vpop.f32.mrf.mxu0
        %v301 = vadd.f32 %v265, %v300
        %v302 = vpop.f32.mrf.mxu0
        %303 = vdwg.mxu0
        %v304 = vpack.c.bf16 %v288, %v288
        %v305 = vpack.c.bf16 %v301, %v301
        %306 = vxpose.xlu0.b32.start [1/16] %v288, 128
        %307 = vxpose.xlu0.b32.cont [2/16] 0.0, 128
        %308 = vxpose.xlu0.b32.cont [3/16] 0.0, 128
        %309 = vxpose.xlu0.b32.cont [4/16] 0.0, 128
        %310 = vxpose.xlu0.b32.cont [5/16] 0.0, 128
        %311 = vxpose.xlu0.b32.cont [6/16] 0.0, 128
        %312 = vxpose.xlu0.b32.cont [7/16] 0.0, 128
        %313 = vxpose.xlu0.b32.cont [8/16] 0.0, 128
        %314 = vxpose.xlu0.b32.cont [9/16] 0.0, 128
        %315 = vxpose.xlu0.b32.cont [10/16] 0.0, 128
        %316 = vxpose.xlu0.b32.cont [11/16] 0.0, 128
        %317 = vxpose.xlu0.b32.cont [12/16] 0.0, 128
        %318 = vxpose.xlu0.b32.cont [13/16] 0.0, 128
        %319 = vxpose.xlu0.b32.cont [14/16] 0.0, 128
        %320 = vxpose.xlu0.b32.cont [15/16] 0.0, 128
        %321 = vxpose.xlu0.b32.end [16/16] 0.0, 128
        %v322 = vpop.trf.xlu0
        %v323 = vpop.trf.xlu0
        %v324 = vpop.trf.xlu0
        %v325 = vpop.trf.xlu0
        %v326 = vpop.trf.xlu0
        %v327 = vpop.trf.xlu0
        %v328 = vpop.trf.xlu0
        %v329 = vpop.trf.xlu0
        %v330 = vpop.trf.xlu0
        %v331 = vpop.trf.xlu0
        %v332 = vpop.trf.xlu0
        %v333 = vpop.trf.xlu0
        %v334 = vpop.trf.xlu0
        %v335 = vpop.trf.xlu0
        %v336 = vpop.trf.xlu0
        %v337 = vpop.trf.xlu0
        %338 = vxpose.xlu0.b32.start [1/16] %v301, 128
        %339 = vxpose.xlu0.b32.cont [2/16] 0.0, 128
        %340 = vxpose.xlu0.b32.cont [3/16] 0.0, 128
        %341 = vxpose.xlu0.b32.cont [4/16] 0.0, 128
        %342 = vxpose.xlu0.b32.cont [5/16] 0.0, 128
        %343 = vxpose.xlu0.b32.cont [6/16] 0.0, 128
        %344 = vxpose.xlu0.b32.cont [7/16] 0.0, 128
        %345 = vxpose.xlu0.b32.cont [8/16] 0.0, 128
        %346 = vxpose.xlu0.b32.cont [9/16] 0.0, 128
        %347 = vxpose.xlu0.b32.cont [10/16] 0.0, 128
        %348 = vxpose.xlu0.b32.cont [11/16] 0.0, 128
        %349 = vxpose.xlu0.b32.cont [12/16] 0.0, 128
        %350 = vxpose.xlu0.b32.cont [13/16] 0.0, 128
        %351 = vxpose.xlu0.b32.cont [14/16] 0.0, 128
        %352 = vxpose.xlu0.b32.cont [15/16] 0.0, 128
        %353 = vxpose.xlu0.b32.end [16/16] 0.0, 128
        %v354 = vpop.trf.xlu0
        %v355 = vpop.trf.xlu0
        %v356 = vpop.trf.xlu0
        %v357 = vpop.trf.xlu0
        %v358 = vpop.trf.xlu0
        %v359 = vpop.trf.xlu0
        %v360 = vpop.trf.xlu0
        %v361 = vpop.trf.xlu0
        %v362 = vpop.trf.xlu0
        %v363 = vpop.trf.xlu0
        %v364 = vpop.trf.xlu0
        %v365 = vpop.trf.xlu0
        %v366 = vpop.trf.xlu0
        %v367 = vpop.trf.xlu0
        %v368 = vpop.trf.xlu0
        %v369 = vpop.trf.xlu0
        %v370 = vpack.c.bf16 %v323, %v322
        %v371 = vpack.c.bf16 %v325, %v324
        %v372 = vpack.c.bf16 %v327, %v326
        %v373 = vpack.c.bf16 %v329, %v328
        %v374 = vpack.c.bf16 %v331, %v330
        %v375 = vpack.c.bf16 %v333, %v332
        %v376 = vpack.c.bf16 %v335, %v334
        %v377 = vpack.c.bf16 %v337, %v336
        %v378 = vpack.c.bf16 %v355, %v354
        %v379 = vpack.c.bf16 %v357, %v356
        %v380 = vpack.c.bf16 %v359, %v358
        %v381 = vpack.c.bf16 %v361, %v360
        %v382 = vpack.c.bf16 %v363, %v362
        %v383 = vpack.c.bf16 %v365, %v364
        %v384 = vpack.c.bf16 %v367, %v366
        %v385 = vpack.c.bf16 %v369, %v368
        %v387 = vsel %vm267, %v370, 0
        %v390 = vsel %vm267, %v371, 0
        %v393 = vsel %vm267, %v372, 0
        %v396 = vsel %vm267, %v373, 0
        %v399 = vsel %vm267, %v374, 0
        %v402 = vsel %vm267, %v375, 0
        %v405 = vsel %vm267, %v376, 0
        %v408 = vsel %vm267, %v377, 0
        %v411 = vsel %vm267, %v378, 0
        %v414 = vsel %vm267, %v379, 0
        %v417 = vsel %vm267, %v380, 0
        %v420 = vsel %vm267, %v381, 0
        %v423 = vsel %vm267, %v382, 0
        %v426 = vsel %vm267, %v383, 0
        %v429 = vsel %vm267, %v384, 0
        %v432 = vsel %vm267, %v385, 0
        %v435 = vsel %vm271, %v304, 0
        %v438 = vsel %vm271, %v305, 0
        %440 = vmatpush.bf16.msra.mxu0 0
        %441 = vmatpush.bf16.msra.mxu0 0
        %442 = vmatpush.bf16.msra.mxu0 0
        %443 = vmatpush.bf16.msra.mxu0 0
        %444 = vmatpush.bf16.msra.mxu0 0
        %445 = vmatpush.bf16.msra.mxu0 0
        %446 = vmatpush.bf16.msra.mxu0 0
        %447 = vmatpush.bf16.msra.mxu0 %v435
        %448 = vmatmul.bf16.gmra.mxu0 %v387
        %v449 = vpop.f32.mrf.mxu0
        %v450 = vadd.f32 0.0, %v449
        %v451 = vpop.f32.mrf.mxu0
        %v452 = vadd.f32 0.0, %v451
        %453 = vmatmul.bf16.gmra.mxu0 %v390
        %v454 = vpop.f32.mrf.mxu0
        %v455 = vadd.f32 0.0, %v454
        %v456 = vpop.f32.mrf.mxu0
        %v457 = vadd.f32 0.0, %v456
        %458 = vmatmul.bf16.gmra.mxu0 %v393
        %v459 = vpop.f32.mrf.mxu0
        %v460 = vadd.f32 0.0, %v459
        %v461 = vpop.f32.mrf.mxu0
        %v462 = vadd.f32 0.0, %v461
        %463 = vmatmul.bf16.gmra.mxu0 %v396
        %v464 = vpop.f32.mrf.mxu0
        %v465 = vadd.f32 0.0, %v464
        %v466 = vpop.f32.mrf.mxu0
        %v467 = vadd.f32 0.0, %v466
        %468 = vmatmul.bf16.gmra.mxu0 %v399
        %v469 = vpop.f32.mrf.mxu0
        %v470 = vadd.f32 0.0, %v469
        %v471 = vpop.f32.mrf.mxu0
        %v472 = vadd.f32 0.0, %v471
        %473 = vmatmul.bf16.gmra.mxu0 %v402
        %v474 = vpop.f32.mrf.mxu0
        %v475 = vadd.f32 0.0, %v474
        %v476 = vpop.f32.mrf.mxu0
        %v477 = vadd.f32 0.0, %v476
        %478 = vmatmul.bf16.gmra.mxu0 %v405
        %v479 = vpop.f32.mrf.mxu0
        %v480 = vadd.f32 0.0, %v479
        %v481 = vpop.f32.mrf.mxu0
        %v482 = vadd.f32 0.0, %v481
        %483 = vmatmul.bf16.gmra.mxu0 %v408
        %v484 = vpop.f32.mrf.mxu0
        %v485 = vadd.f32 0.0, %v484
        %v486 = vpop.f32.mrf.mxu0
        %v487 = vadd.f32 0.0, %v486
        %488 = vmatmul.bf16.gmra.mxu0 %v411
        %v489 = vpop.f32.mrf.mxu0
        %v490 = vadd.f32 0.0, %v489
        %v491 = vpop.f32.mrf.mxu0
        %v492 = vadd.f32 0.0, %v491
        %493 = vmatmul.bf16.gmra.mxu0 %v414
        %v494 = vpop.f32.mrf.mxu0
        %v495 = vadd.f32 0.0, %v494
        %v496 = vpop.f32.mrf.mxu0
        %v497 = vadd.f32 0.0, %v496
        %498 = vmatmul.bf16.gmra.mxu0 %v417
        %v499 = vpop.f32.mrf.mxu0
        %v500 = vadd.f32 0.0, %v499
        %v501 = vpop.f32.mrf.mxu0
        %v502 = vadd.f32 0.0, %v501
        %503 = vmatmul.bf16.gmra.mxu0 %v420
        %v504 = vpop.f32.mrf.mxu0
        %v505 = vadd.f32 0.0, %v504
        %v506 = vpop.f32.mrf.mxu0
        %v507 = vadd.f32 0.0, %v506
        %508 = vmatmul.bf16.gmra.mxu0 %v423
        %v509 = vpop.f32.mrf.mxu0
        %v510 = vadd.f32 0.0, %v509
        %v511 = vpop.f32.mrf.mxu0
        %v512 = vadd.f32 0.0, %v511
        %513 = vmatmul.bf16.gmra.mxu0 %v426
        %v514 = vpop.f32.mrf.mxu0
        %v515 = vadd.f32 0.0, %v514
        %v516 = vpop.f32.mrf.mxu0
        %v517 = vadd.f32 0.0, %v516
        %518 = vmatmul.bf16.gmra.mxu0 %v429
        %v519 = vpop.f32.mrf.mxu0
        %v520 = vadd.f32 0.0, %v519
        %v521 = vpop.f32.mrf.mxu0
        %v522 = vadd.f32 0.0, %v521
        %523 = vmatmul.bf16.gmra.mxu0 %v432
        %v524 = vpop.f32.mrf.mxu0
        %v525 = vadd.f32 0.0, %v524
        %v526 = vpop.f32.mrf.mxu0
        %v527 = vadd.f32 0.0, %v526
        %528 = vdwg.mxu0
        %529 = vmatpush.bf16.msra.mxu0 0
        %530 = vmatpush.bf16.msra.mxu0 0
        %531 = vmatpush.bf16.msra.mxu0 0
        %532 = vmatpush.bf16.msra.mxu0 0
        %533 = vmatpush.bf16.msra.mxu0 0
        %534 = vmatpush.bf16.msra.mxu0 0
        %535 = vmatpush.bf16.msra.mxu0 0
        %536 = vmatpush.bf16.msra.mxu0 %v438
        %537 = vmatmul.bf16.gmra.mxu0 %v387
        %v538 = vpop.f32.mrf.mxu0
        %v539 = vadd.f32 0.0, %v538
        %v540 = vpop.f32.mrf.mxu0
        %v541 = vadd.f32 0.0, %v540
        %542 = vmatmul.bf16.gmra.mxu0 %v390
        %v543 = vpop.f32.mrf.mxu0
        %v544 = vadd.f32 0.0, %v543
        %v545 = vpop.f32.mrf.mxu0
        %v546 = vadd.f32 0.0, %v545
        %547 = vmatmul.bf16.gmra.mxu0 %v393
        %v548 = vpop.f32.mrf.mxu0
        %v549 = vadd.f32 0.0, %v548
        %v550 = vpop.f32.mrf.mxu0
        %v551 = vadd.f32 0.0, %v550
        %552 = vmatmul.bf16.gmra.mxu0 %v396
        %v553 = vpop.f32.mrf.mxu0
        %v554 = vadd.f32 0.0, %v553
        %v555 = vpop.f32.mrf.mxu0
        %v556 = vadd.f32 0.0, %v555
        %557 = vmatmul.bf16.gmra.mxu0 %v399
        %v558 = vpop.f32.mrf.mxu0
        %v559 = vadd.f32 0.0, %v558
        %v560 = vpop.f32.mrf.mxu0
        %v561 = vadd.f32 0.0, %v560
        %562 = vmatmul.bf16.gmra.mxu0 %v402
        %v563 = vpop.f32.mrf.mxu0
        %v564 = vadd.f32 0.0, %v563
        %v565 = vpop.f32.mrf.mxu0
        %v566 = vadd.f32 0.0, %v565
        %567 = vmatmul.bf16.gmra.mxu0 %v405
        %v568 = vpop.f32.mrf.mxu0
        %v569 = vadd.f32 0.0, %v568
        %v570 = vpop.f32.mrf.mxu0
        %v571 = vadd.f32 0.0, %v570
        %572 = vmatmul.bf16.gmra.mxu0 %v408
        %v573 = vpop.f32.mrf.mxu0
        %v574 = vadd.f32 0.0, %v573
        %v575 = vpop.f32.mrf.mxu0
        %v576 = vadd.f32 0.0, %v575
        %577 = vmatmul.bf16.gmra.mxu0 %v411
        %v578 = vpop.f32.mrf.mxu0
        %v579 = vadd.f32 0.0, %v578
        %v580 = vpop.f32.mrf.mxu0
        %v581 = vadd.f32 0.0, %v580
        %582 = vmatmul.bf16.gmra.mxu0 %v414
        %v583 = vpop.f32.mrf.mxu0
        %v584 = vadd.f32 0.0, %v583
        %v585 = vpop.f32.mrf.mxu0
        %v586 = vadd.f32 0.0, %v585
        %587 = vmatmul.bf16.gmra.mxu0 %v417
        %v588 = vpop.f32.mrf.mxu0
        %v589 = vadd.f32 0.0, %v588
        %v590 = vpop.f32.mrf.mxu0
        %v591 = vadd.f32 0.0, %v590
        %592 = vmatmul.bf16.gmra.mxu0 %v420
        %v593 = vpop.f32.mrf.mxu0
        %v594 = vadd.f32 0.0, %v593
        %v595 = vpop.f32.mrf.mxu0
        %v596 = vadd.f32 0.0, %v595
        %597 = vmatmul.bf16.gmra.mxu0 %v423
        %v598 = vpop.f32.mrf.mxu0
        %v599 = vadd.f32 0.0, %v598
        %v600 = vpop.f32.mrf.mxu0
        %v601 = vadd.f32 0.0, %v600
        %602 = vmatmul.bf16.gmra.mxu0 %v426
        %v603 = vpop.f32.mrf.mxu0
        %v604 = vadd.f32 0.0, %v603
        %v605 = vpop.f32.mrf.mxu0
        %v606 = vadd.f32 0.0, %v605
        %607 = vmatmul.bf16.gmra.mxu0 %v429
        %v608 = vpop.f32.mrf.mxu0
        %v609 = vadd.f32 0.0, %v608
        %v610 = vpop.f32.mrf.mxu0
        %v611 = vadd.f32 0.0, %v610
        %612 = vmatmul.bf16.gmra.mxu0 %v432
        %v613 = vpop.f32.mrf.mxu0
        %v614 = vadd.f32 0.0, %v613
        %v615 = vpop.f32.mrf.mxu0
        %v616 = vadd.f32 0.0, %v615
        %617 = vdwg.mxu0
        %v618 = vmax.f32 %v450, %v455
        %v619 = vmax.f32 %v452, %v457
        %v620 = vmax.f32 %v618, %v460
        %v621 = vmax.f32 %v619, %v462
        %v622 = vmax.f32 %v620, %v465
        %v623 = vmax.f32 %v621, %v467
        %v624 = vmax.f32 %v622, %v470
        %v625 = vmax.f32 %v623, %v472
        %v626 = vmax.f32 %v624, %v475
        %v627 = vmax.f32 %v625, %v477
        %v628 = vmax.f32 %v626, %v480
        %v629 = vmax.f32 %v627, %v482
        %v630 = vmax.f32 %v628, %v485
        %v631 = vmax.f32 %v629, %v487
        %v632 = vmax.f32 %v630, %v490
        %v633 = vmax.f32 %v631, %v492
        %v634 = vmax.f32 %v632, %v495
        %v635 = vmax.f32 %v633, %v497
        %v636 = vmax.f32 %v634, %v500
        %v637 = vmax.f32 %v635, %v502
        %v638 = vmax.f32 %v636, %v505
        %v639 = vmax.f32 %v637, %v507
        %v640 = vmax.f32 %v638, %v510
        %v641 = vmax.f32 %v639, %v512
        %v642 = vmax.f32 %v640, %v515
        %v643 = vmax.f32 %v641, %v517
        %v644 = vmax.f32 %v642, %v520
        %v645 = vmax.f32 %v643, %v522
        %v646 = vmax.f32 %v644, %v525
        %v647 = vmax.f32 %v645, %v527
        %v648 = vmax.f32 %v646, %v647
        %v649 = vrot.slane %v648, 4
        %v650 = vmax.f32 %v648, %v649
        %v651 = vrot.slane %v650, 2
        %v652 = vmax.f32 %v650, %v651
        %v653 = vrot.slane %v652, 1
        %v654 = vmax.f32 %v652, %v653
        %v655 = vmax.f32 %v539, %v544
        %v656 = vmax.f32 %v541, %v546
        %v657 = vmax.f32 %v655, %v549
        %v658 = vmax.f32 %v656, %v551
        %v659 = vmax.f32 %v657, %v554
        %v660 = vmax.f32 %v658, %v556
        %v661 = vmax.f32 %v659, %v559
        %v662 = vmax.f32 %v660, %v561
        %v663 = vmax.f32 %v661, %v564
        %v664 = vmax.f32 %v662, %v566
        %v665 = vmax.f32 %v663, %v569
        %v666 = vmax.f32 %v664, %v571
        %v667 = vmax.f32 %v665, %v574
        %v668 = vmax.f32 %v666, %v576
        %v669 = vmax.f32 %v667, %v579
        %v670 = vmax.f32 %v668, %v581
        %v671 = vmax.f32 %v669, %v584
        %v672 = vmax.f32 %v670, %v586
        %v673 = vmax.f32 %v671, %v589
        %v674 = vmax.f32 %v672, %v591
        %v675 = vmax.f32 %v673, %v594
        %v676 = vmax.f32 %v674, %v596
        %v677 = vmax.f32 %v675, %v599
        %v678 = vmax.f32 %v676, %v601
        %v679 = vmax.f32 %v677, %v604
        %v680 = vmax.f32 %v678, %v606
        %v681 = vmax.f32 %v679, %v609
        %v682 = vmax.f32 %v680, %v611
        %v683 = vmax.f32 %v681, %v614
        %v684 = vmax.f32 %v682, %v616
        %v685 = vmax.f32 %v683, %v684
        %v686 = vrot.slane %v685, 4
        %v687 = vmax.f32 %v685, %v686
        %v688 = vrot.slane %v687, 2
        %v689 = vmax.f32 %v687, %v688
        %v690 = vrot.slane %v689, 1
        %v691 = vmax.f32 %v689, %v690
        %v692 = vsub.f32 %v450, %v654
        %v693 = vsub.f32 %v539, %v691
        %v694 = vsub.f32 %v452, %v654
        %v695 = vsub.f32 %v541, %v691
        %v696 = vsub.f32 %v455, %v654
        %v697 = vsub.f32 %v544, %v691
        %v698 = vsub.f32 %v457, %v654
        %v699 = vsub.f32 %v546, %v691
        %v700 = vsub.f32 %v460, %v654
        %v701 = vsub.f32 %v549, %v691
        %v702 = vsub.f32 %v462, %v654
        %v703 = vsub.f32 %v551, %v691
        %v704 = vsub.f32 %v465, %v654
        %v705 = vsub.f32 %v554, %v691
        %v706 = vsub.f32 %v467, %v654
        %v707 = vsub.f32 %v556, %v691
        %v708 = vsub.f32 %v470, %v654
        %v709 = vsub.f32 %v559, %v691
        %v710 = vsub.f32 %v472, %v654
        %v711 = vsub.f32 %v561, %v691
        %v712 = vsub.f32 %v475, %v654
        %v713 = vsub.f32 %v564, %v691
        %v714 = vsub.f32 %v477, %v654
        %v715 = vsub.f32 %v566, %v691
        %v716 = vsub.f32 %v480, %v654
        %v717 = vsub.f32 %v569, %v691
        %v718 = vsub.f32 %v482, %v654
        %v719 = vsub.f32 %v571, %v691
        %v720 = vsub.f32 %v485, %v654
        %v721 = vsub.f32 %v574, %v691
        %v722 = vsub.f32 %v487, %v654
        %v723 = vsub.f32 %v576, %v691
        %v724 = vsub.f32 %v490, %v654
        %v725 = vsub.f32 %v579, %v691
        %v726 = vsub.f32 %v492, %v654
        %v727 = vsub.f32 %v581, %v691
        %v728 = vsub.f32 %v495, %v654
        %v729 = vsub.f32 %v584, %v691
        %v730 = vsub.f32 %v497, %v654
        %v731 = vsub.f32 %v586, %v691
        %v732 = vsub.f32 %v500, %v654
        %v733 = vsub.f32 %v589, %v691
        %v734 = vsub.f32 %v502, %v654
        %v735 = vsub.f32 %v591, %v691
        %v736 = vsub.f32 %v505, %v654
        %v737 = vsub.f32 %v594, %v691
        %v738 = vsub.f32 %v507, %v654
        %v739 = vsub.f32 %v596, %v691
        %v740 = vsub.f32 %v510, %v654
        %v741 = vsub.f32 %v599, %v691
        %v742 = vsub.f32 %v512, %v654
        %v743 = vsub.f32 %v601, %v691
        %v744 = vsub.f32 %v515, %v654
        %v745 = vsub.f32 %v604, %v691
        %v746 = vsub.f32 %v517, %v654
        %v747 = vsub.f32 %v606, %v691
        %v748 = vsub.f32 %v520, %v654
        %v749 = vsub.f32 %v609, %v691
        %v750 = vsub.f32 %v522, %v654
        %v751 = vsub.f32 %v611, %v691
        %v752 = vsub.f32 %v525, %v654
        %v753 = vsub.f32 %v614, %v691
        %v754 = vsub.f32 %v527, %v654
        %v755 = vsub.f32 %v616, %v691
        %v756 = vmul.f32 %v692, 1.442695
        %v757 = vpow.pop %v756
        %v758 = vmul.f32 %v693, 1.442695
        %v759 = vpow.pop %v758
        %v760 = vmul.f32 %v694, 1.442695
        %v761 = vpow.pop %v760
        %v762 = vmul.f32 %v695, 1.442695
        %v763 = vpow.pop %v762
        %v764 = vmul.f32 %v696, 1.442695
        %v765 = vpow.pop %v764
        %v766 = vmul.f32 %v697, 1.442695
        %v767 = vpow.pop %v766
        %v768 = vmul.f32 %v698, 1.442695
        %v769 = vpow.pop %v768
        %v770 = vmul.f32 %v699, 1.442695
        %v771 = vpow.pop %v770
        %v772 = vmul.f32 %v700, 1.442695
        %v773 = vpow.pop %v772
        %v774 = vmul.f32 %v701, 1.442695
        %v775 = vpow.pop %v774
        %v776 = vmul.f32 %v702, 1.442695
        %v777 = vpow.pop %v776
        %v778 = vmul.f32 %v703, 1.442695
        %v779 = vpow.pop %v778
        %v780 = vmul.f32 %v704, 1.442695
        %v781 = vpow.pop %v780
        %v782 = vmul.f32 %v705, 1.442695
        %v783 = vpow.pop %v782
        %v784 = vmul.f32 %v706, 1.442695
        %v785 = vpow.pop %v784
        %v786 = vmul.f32 %v707, 1.442695
        %v787 = vpow.pop %v786
        %v788 = vmul.f32 %v708, 1.442695
        %v789 = vpow.pop %v788
        %v790 = vmul.f32 %v709, 1.442695
        %v791 = vpow.pop %v790
        %v792 = vmul.f32 %v710, 1.442695
        %v793 = vpow.pop %v792
        %v794 = vmul.f32 %v711, 1.442695
        %v795 = vpow.pop %v794
        %v796 = vmul.f32 %v712, 1.442695
        %v797 = vpow.pop %v796
        %v798 = vmul.f32 %v713, 1.442695
        %v799 = vpow.pop %v798
        %v800 = vmul.f32 %v714, 1.442695
        %v801 = vpow.pop %v800
        %v802 = vmul.f32 %v715, 1.442695
        %v803 = vpow.pop %v802
        %v804 = vmul.f32 %v716, 1.442695
        %v805 = vpow.pop %v804
        %v806 = vmul.f32 %v717, 1.442695
        %v807 = vpow.pop %v806
        %v808 = vmul.f32 %v718, 1.442695
        %v809 = vpow.pop %v808
        %v810 = vmul.f32 %v719, 1.442695
        %v811 = vpow.pop %v810
        %v812 = vmul.f32 %v720, 1.442695
        %v813 = vpow.pop %v812
        %v814 = vmul.f32 %v721, 1.442695
        %v815 = vpow.pop %v814
        %v816 = vmul.f32 %v722, 1.442695
        %v817 = vpow.pop %v816
        %v818 = vmul.f32 %v723, 1.442695
        %v819 = vpow.pop %v818
        %v820 = vmul.f32 %v724, 1.442695
        %v821 = vpow.pop %v820
        %v822 = vmul.f32 %v725, 1.442695
        %v823 = vpow.pop %v822
        %v824 = vmul.f32 %v726, 1.442695
        %v825 = vpow.pop %v824
        %v826 = vmul.f32 %v727, 1.442695
        %v827 = vpow.pop %v826
        %v828 = vmul.f32 %v728, 1.442695
        %v829 = vpow.pop %v828
        %v830 = vmul.f32 %v729, 1.442695
        %v831 = vpow.pop %v830
        %v832 = vmul.f32 %v730, 1.442695
        %v833 = vpow.pop %v832
        %v834 = vmul.f32 %v731, 1.442695
        %v835 = vpow.pop %v834
        %v836 = vmul.f32 %v732, 1.442695
        %v837 = vpow.pop %v836
        %v838 = vmul.f32 %v733, 1.442695
        %v839 = vpow.pop %v838
        %v840 = vmul.f32 %v734, 1.442695
        %v841 = vpow.pop %v840
        %v842 = vmul.f32 %v735, 1.442695
        %v843 = vpow.pop %v842
        %v844 = vmul.f32 %v736, 1.442695
        %v845 = vpow.pop %v844
        %v846 = vmul.f32 %v737, 1.442695
        %v847 = vpow.pop %v846
        %v848 = vmul.f32 %v738, 1.442695
        %v849 = vpow.pop %v848
        %v850 = vmul.f32 %v739, 1.442695
        %v851 = vpow.pop %v850
        %v852 = vmul.f32 %v740, 1.442695
        %v853 = vpow.pop %v852
        %v854 = vmul.f32 %v741, 1.442695
        %v855 = vpow.pop %v854
        %v856 = vmul.f32 %v742, 1.442695
        %v857 = vpow.pop %v856
        %v858 = vmul.f32 %v743, 1.442695
        %v859 = vpow.pop %v858
        %v860 = vmul.f32 %v744, 1.442695
        %v861 = vpow.pop %v860
        %v862 = vmul.f32 %v745, 1.442695
        %v863 = vpow.pop %v862
        %v864 = vmul.f32 %v746, 1.442695
        %v865 = vpow.pop %v864
        %v866 = vmul.f32 %v747, 1.442695
        %v867 = vpow.pop %v866
        %v868 = vmul.f32 %v748, 1.442695
        %v869 = vpow.pop %v868
        %v870 = vmul.f32 %v749, 1.442695
        %v871 = vpow.pop %v870
        %v872 = vmul.f32 %v750, 1.442695
        %v873 = vpow.pop %v872
        %v874 = vmul.f32 %v751, 1.442695
        %v875 = vpow.pop %v874
        %v876 = vmul.f32 %v752, 1.442695
        %v877 = vpow.pop %v876
        %v878 = vmul.f32 %v753, 1.442695
        %v879 = vpow.pop %v878
        %v880 = vmul.f32 %v754, 1.442695
        %v881 = vpow.pop %v880
        %v882 = vmul.f32 %v755, 1.442695
        %v883 = vpow.pop %v882
        %v884 = vadd.f32 %v757, %v761
        %v885 = vadd.f32 %v884, %v765
        %v886 = vadd.f32 %v885, %v769
        %v887 = vadd.f32 %v886, %v773
        %v888 = vadd.f32 %v887, %v777
        %v889 = vadd.f32 %v888, %v781
        %v890 = vadd.f32 %v889, %v785
        %v891 = vadd.f32 %v890, %v789
        %v892 = vadd.f32 %v891, %v793
        %v893 = vadd.f32 %v892, %v797
        %v894 = vadd.f32 %v893, %v801
        %v895 = vadd.f32 %v894, %v805
        %v896 = vadd.f32 %v895, %v809
        %v897 = vadd.f32 %v896, %v813
        %v898 = vadd.f32 %v897, %v817
        %v899 = vadd.f32 %v898, %v821
        %v900 = vadd.f32 %v899, %v825
        %v901 = vadd.f32 %v900, %v829
        %v902 = vadd.f32 %v901, %v833
        %v903 = vadd.f32 %v902, %v837
        %v904 = vadd.f32 %v903, %v841
        %v905 = vadd.f32 %v904, %v845
        %v906 = vadd.f32 %v905, %v849
        %v907 = vadd.f32 %v906, %v853
        %v908 = vadd.f32 %v907, %v857
        %v909 = vadd.f32 %v908, %v861
        %v910 = vadd.f32 %v909, %v865
        %v911 = vadd.f32 %v910, %v869
        %v912 = vadd.f32 %v911, %v873
        %v913 = vadd.f32 %v912, %v877
        %v914 = vadd.f32 %v913, %v881
        %v915 = vrot.slane %v914, 4
        %v916 = vadd.f32 %v914, %v915
        %v917 = vrot.slane %v916, 2
        %v918 = vadd.f32 %v916, %v917
        %v919 = vrot.slane %v918, 1
        %v920 = vadd.f32 %v918, %v919
        %v921 = vadd.f32 %v759, %v763
        %v922 = vadd.f32 %v921, %v767
        %v923 = vadd.f32 %v922, %v771
        %v924 = vadd.f32 %v923, %v775
        %v925 = vadd.f32 %v924, %v779
        %v926 = vadd.f32 %v925, %v783
        %v927 = vadd.f32 %v926, %v787
        %v928 = vadd.f32 %v927, %v791
        %v929 = vadd.f32 %v928, %v795
        %v930 = vadd.f32 %v929, %v799
        %v931 = vadd.f32 %v930, %v803
        %v932 = vadd.f32 %v931, %v807
        %v933 = vadd.f32 %v932, %v811
        %v934 = vadd.f32 %v933, %v815
        %v935 = vadd.f32 %v934, %v819
        %v936 = vadd.f32 %v935, %v823
        %v937 = vadd.f32 %v936, %v827
        %v938 = vadd.f32 %v937, %v831
        %v939 = vadd.f32 %v938, %v835
        %v940 = vadd.f32 %v939, %v839
        %v941 = vadd.f32 %v940, %v843
        %v942 = vadd.f32 %v941, %v847
        %v943 = vadd.f32 %v942, %v851
        %v944 = vadd.f32 %v943, %v855
        %v945 = vadd.f32 %v944, %v859
        %v946 = vadd.f32 %v945, %v863
        %v947 = vadd.f32 %v946, %v867
        %v948 = vadd.f32 %v947, %v871
        %v949 = vadd.f32 %v948, %v875
        %v950 = vadd.f32 %v949, %v879
        %v951 = vadd.f32 %v950, %v883
        %v952 = vrot.slane %v951, 4
        %v953 = vadd.f32 %v951, %v952
        %v954 = vrot.slane %v953, 2
        %v955 = vadd.f32 %v953, %v954
        %v956 = vrot.slane %v955, 1
        %v957 = vadd.f32 %v955, %v956
        %v958 = vrcp.pop %v920
        %v959 = vrcp.pop %v957
        %v960 = vmul.f32 %v757, %v958
        %v961 = vmul.f32 %v759, %v959
        %v962 = vmul.f32 %v761, %v958
        %v963 = vmul.f32 %v763, %v959
        %v964 = vmul.f32 %v765, %v958
        %v965 = vmul.f32 %v767, %v959
        %v966 = vmul.f32 %v769, %v958
        %v967 = vmul.f32 %v771, %v959
        %v968 = vmul.f32 %v773, %v958
        %v969 = vmul.f32 %v775, %v959
        %v970 = vmul.f32 %v777, %v958
        %v971 = vmul.f32 %v779, %v959
        %v972 = vmul.f32 %v781, %v958
        %v973 = vmul.f32 %v783, %v959
        %v974 = vmul.f32 %v785, %v958
        %v975 = vmul.f32 %v787, %v959
        %v976 = vmul.f32 %v789, %v958
        %v977 = vmul.f32 %v791, %v959
        %v978 = vmul.f32 %v793, %v958
        %v979 = vmul.f32 %v795, %v959
        %v980 = vmul.f32 %v797, %v958
        %v981 = vmul.f32 %v799, %v959
        %v982 = vmul.f32 %v801, %v958
        %v983 = vmul.f32 %v803, %v959
        %v984 = vmul.f32 %v805, %v958
        %v985 = vmul.f32 %v807, %v959
        %v986 = vmul.f32 %v809, %v958
        %v987 = vmul.f32 %v811, %v959
        %v988 = vmul.f32 %v813, %v958
        %v989 = vmul.f32 %v815, %v959
        %v990 = vmul.f32 %v817, %v958
        %v991 = vmul.f32 %v819, %v959
        %v992 = vmul.f32 %v821, %v958
        %v993 = vmul.f32 %v823, %v959
        %v994 = vmul.f32 %v825, %v958
        %v995 = vmul.f32 %v827, %v959
        %v996 = vmul.f32 %v829, %v958
        %v997 = vmul.f32 %v831, %v959
        %v998 = vmul.f32 %v833, %v958
        %v999 = vmul.f32 %v835, %v959
        %v1000 = vmul.f32 %v837, %v958
        %v1001 = vmul.f32 %v839, %v959
        %v1002 = vmul.f32 %v841, %v958
        %v1003 = vmul.f32 %v843, %v959
        %v1004 = vmul.f32 %v845, %v958
        %v1005 = vmul.f32 %v847, %v959
        %v1006 = vmul.f32 %v849, %v958
        %v1007 = vmul.f32 %v851, %v959
        %v1008 = vmul.f32 %v853, %v958
        %v1009 = vmul.f32 %v855, %v959
        %v1010 = vmul.f32 %v857, %v958
        %v1011 = vmul.f32 %v859, %v959
        %v1012 = vmul.f32 %v861, %v958
        %v1013 = vmul.f32 %v863, %v959
        %v1014 = vmul.f32 %v865, %v958
        %v1015 = vmul.f32 %v867, %v959
        %v1016 = vmul.f32 %v869, %v958
        %v1017 = vmul.f32 %v871, %v959
        %v1018 = vmul.f32 %v873, %v958
        %v1019 = vmul.f32 %v875, %v959
        %v1020 = vmul.f32 %v877, %v958
        %v1021 = vmul.f32 %v879, %v959
        %v1022 = vmul.f32 %v881, %v958
        %v1023 = vmul.f32 %v883, %v959
        %v1024 = vpack.c.bf16 %v962, %v960
        %v1025 = vpack.c.bf16 %v963, %v961
        %v1026 = vpack.c.bf16 %v966, %v964
        %v1027 = vpack.c.bf16 %v967, %v965
        %v1028 = vpack.c.bf16 %v970, %v968
        %v1029 = vpack.c.bf16 %v971, %v969
        %v1030 = vpack.c.bf16 %v974, %v972
        %v1031 = vpack.c.bf16 %v975, %v973
        %v1032 = vpack.c.bf16 %v978, %v976
        %v1033 = vpack.c.bf16 %v979, %v977
        %v1034 = vpack.c.bf16 %v982, %v980
        %v1035 = vpack.c.bf16 %v983, %v981
        %v1036 = vpack.c.bf16 %v986, %v984
        %v1037 = vpack.c.bf16 %v987, %v985
        %v1038 = vpack.c.bf16 %v990, %v988
        %v1039 = vpack.c.bf16 %v991, %v989
        %v1040 = vpack.c.bf16 %v994, %v992
        %v1041 = vpack.c.bf16 %v995, %v993
        %v1042 = vpack.c.bf16 %v998, %v996
        %v1043 = vpack.c.bf16 %v999, %v997
        %v1044 = vpack.c.bf16 %v1002, %v1000
        %v1045 = vpack.c.bf16 %v1003, %v1001
        %v1046 = vpack.c.bf16 %v1006, %v1004
        %v1047 = vpack.c.bf16 %v1007, %v1005
        %v1048 = vpack.c.bf16 %v1010, %v1008
        %v1049 = vpack.c.bf16 %v1011, %v1009
        %v1050 = vpack.c.bf16 %v1014, %v1012
        %v1051 = vpack.c.bf16 %v1015, %v1013
        %v1052 = vpack.c.bf16 %v1018, %v1016
        %v1053 = vpack.c.bf16 %v1019, %v1017
        %v1054 = vpack.c.bf16 %v1022, %v1020
        %v1055 = vpack.c.bf16 %v1023, %v1021
        %v1056 = vmax.f32 %v450, %v539
        %1057 = vmax.xlane.f32.xlu0 %v1056
        %v1058 = vpop.xlane.xlu0 %1057
        %v1059 = vmax.f32 %v452, %v541
        %1060 = vmax.xlane.f32.xlu0 %v1059
        %v1061 = vpop.xlane.xlu0 %1060
        %v1062 = vmax.f32 %v455, %v544
        %1063 = vmax.xlane.f32.xlu0 %v1062
        %v1064 = vpop.xlane.xlu0 %1063
        %v1065 = vmax.f32 %v457, %v546
        %1066 = vmax.xlane.f32.xlu0 %v1065
        %v1067 = vpop.xlane.xlu0 %1066
        %v1068 = vmax.f32 %v460, %v549
        %1069 = vmax.xlane.f32.xlu0 %v1068
        %v1070 = vpop.xlane.xlu0 %1069
        %v1071 = vmax.f32 %v462, %v551
        %1072 = vmax.xlane.f32.xlu0 %v1071
        %v1073 = vpop.xlane.xlu0 %1072
        %v1074 = vmax.f32 %v465, %v554
        %1075 = vmax.xlane.f32.xlu0 %v1074
        %v1076 = vpop.xlane.xlu0 %1075
        %v1077 = vmax.f32 %v467, %v556
        %1078 = vmax.xlane.f32.xlu0 %v1077
        %v1079 = vpop.xlane.xlu0 %1078
        %v1080 = vmax.f32 %v470, %v559
        %1081 = vmax.xlane.f32.xlu0 %v1080
        %v1082 = vpop.xlane.xlu0 %1081
        %v1083 = vmax.f32 %v472, %v561
        %1084 = vmax.xlane.f32.xlu0 %v1083
        %v1085 = vpop.xlane.xlu0 %1084
        %v1086 = vmax.f32 %v475, %v564
        %1087 = vmax.xlane.f32.xlu0 %v1086
        %v1088 = vpop.xlane.xlu0 %1087
        %v1089 = vmax.f32 %v477, %v566
        %1090 = vmax.xlane.f32.xlu0 %v1089
        %v1091 = vpop.xlane.xlu0 %1090
        %v1092 = vmax.f32 %v480, %v569
        %1093 = vmax.xlane.f32.xlu0 %v1092
        %v1094 = vpop.xlane.xlu0 %1093
        %v1095 = vmax.f32 %v482, %v571
        %1096 = vmax.xlane.f32.xlu0 %v1095
        %v1097 = vpop.xlane.xlu0 %1096
        %v1098 = vmax.f32 %v485, %v574
        %1099 = vmax.xlane.f32.xlu0 %v1098
        %v1100 = vpop.xlane.xlu0 %1099
        %v1101 = vmax.f32 %v487, %v576
        %1102 = vmax.xlane.f32.xlu0 %v1101
        %v1103 = vpop.xlane.xlu0 %1102
        %v1104 = vmax.f32 %v490, %v579
        %1105 = vmax.xlane.f32.xlu0 %v1104
        %v1106 = vpop.xlane.xlu0 %1105
        %v1107 = vmax.f32 %v492, %v581
        %1108 = vmax.xlane.f32.xlu0 %v1107
        %v1109 = vpop.xlane.xlu0 %1108
        %v1110 = vmax.f32 %v495, %v584
        %1111 = vmax.xlane.f32.xlu0 %v1110
        %v1112 = vpop.xlane.xlu0 %1111
        %v1113 = vmax.f32 %v497, %v586
        %1114 = vmax.xlane.f32.xlu0 %v1113
        %v1115 = vpop.xlane.xlu0 %1114
        %v1116 = vmax.f32 %v500, %v589
        %1117 = vmax.xlane.f32.xlu0 %v1116
        %v1118 = vpop.xlane.xlu0 %1117
        %v1119 = vmax.f32 %v502, %v591
        %1120 = vmax.xlane.f32.xlu0 %v1119
        %v1121 = vpop.xlane.xlu0 %1120
        %v1122 = vmax.f32 %v505, %v594
        %1123 = vmax.xlane.f32.xlu0 %v1122
        %v1124 = vpop.xlane.xlu0 %1123
        %v1125 = vmax.f32 %v507, %v596
        %1126 = vmax.xlane.f32.xlu0 %v1125
        %v1127 = vpop.xlane.xlu0 %1126
        %v1128 = vmax.f32 %v510, %v599
        %1129 = vmax.xlane.f32.xlu0 %v1128
        %v1130 = vpop.xlane.xlu0 %1129
        %v1131 = vmax.f32 %v512, %v601
        %1132 = vmax.xlane.f32.xlu0 %v1131
        %v1133 = vpop.xlane.xlu0 %1132
        %v1134 = vmax.f32 %v515, %v604
        %1135 = vmax.xlane.f32.xlu0 %v1134
        %v1136 = vpop.xlane.xlu0 %1135
        %v1137 = vmax.f32 %v517, %v606
        %1138 = vmax.xlane.f32.xlu0 %v1137
        %v1139 = vpop.xlane.xlu0 %1138
        %v1140 = vmax.f32 %v520, %v609
        %1141 = vmax.xlane.f32.xlu0 %v1140
        %v1142 = vpop.xlane.xlu0 %1141
        %v1143 = vmax.f32 %v522, %v611
        %1144 = vmax.xlane.f32.xlu0 %v1143
        %v1145 = vpop.xlane.xlu0 %1144
        %v1146 = vmax.f32 %v525, %v614
        %1147 = vmax.xlane.f32.xlu0 %v1146
        %v1148 = vpop.xlane.xlu0 %1147
        %v1149 = vmax.f32 %v527, %v616
        %1150 = vmax.xlane.f32.xlu0 %v1149
        %v1151 = vpop.xlane.xlu0 %1150
        %v1152 = vsub.f32 %v450, %v1058
        %v1153 = vsub.f32 %v539, %v1058
        %v1154 = vsub.f32 %v452, %v1061
        %v1155 = vsub.f32 %v541, %v1061
        %v1156 = vsub.f32 %v455, %v1064
        %v1157 = vsub.f32 %v544, %v1064
        %v1158 = vsub.f32 %v457, %v1067
        %v1159 = vsub.f32 %v546, %v1067
        %v1160 = vsub.f32 %v460, %v1070
        %v1161 = vsub.f32 %v549, %v1070
        %v1162 = vsub.f32 %v462, %v1073
        %v1163 = vsub.f32 %v551, %v1073
        %v1164 = vsub.f32 %v465, %v1076
        %v1165 = vsub.f32 %v554, %v1076
        %v1166 = vsub.f32 %v467, %v1079
        %v1167 = vsub.f32 %v556, %v1079
        %v1168 = vsub.f32 %v470, %v1082
        %v1169 = vsub.f32 %v559, %v1082
        %v1170 = vsub.f32 %v472, %v1085
        %v1171 = vsub.f32 %v561, %v1085
        %v1172 = vsub.f32 %v475, %v1088
        %v1173 = vsub.f32 %v564, %v1088
        %v1174 = vsub.f32 %v477, %v1091
        %v1175 = vsub.f32 %v566, %v1091
        %v1176 = vsub.f32 %v480, %v1094
        %v1177 = vsub.f32 %v569, %v1094
        %v1178 = vsub.f32 %v482, %v1097
        %v1179 = vsub.f32 %v571, %v1097
        %v1180 = vsub.f32 %v485, %v1100
        %v1181 = vsub.f32 %v574, %v1100
        %v1182 = vsub.f32 %v487, %v1103
        %v1183 = vsub.f32 %v576, %v1103
        %v1184 = vsub.f32 %v490, %v1106
        %v1185 = vsub.f32 %v579, %v1106
        %v1186 = vsub.f32 %v492, %v1109
        %v1187 = vsub.f32 %v581, %v1109
        %v1188 = vsub.f32 %v495, %v1112
        %v1189 = vsub.f32 %v584, %v1112
        %v1190 = vsub.f32 %v497, %v1115
        %v1191 = vsub.f32 %v586, %v1115
        %v1192 = vsub.f32 %v500, %v1118
        %v1193 = vsub.f32 %v589, %v1118
        %v1194 = vsub.f32 %v502, %v1121
        %v1195 = vsub.f32 %v591, %v1121
        %v1196 = vsub.f32 %v505, %v1124
        %v1197 = vsub.f32 %v594, %v1124
        %v1198 = vsub.f32 %v507, %v1127
        %v1199 = vsub.f32 %v596, %v1127
        %v1200 = vsub.f32 %v510, %v1130
        %v1201 = vsub.f32 %v599, %v1130
        %v1202 = vsub.f32 %v512, %v1133
        %v1203 = vsub.f32 %v601, %v1133
        %v1204 = vsub.f32 %v515, %v1136
        %v1205 = vsub.f32 %v604, %v1136
        %v1206 = vsub.f32 %v517, %v1139
        %v1207 = vsub.f32 %v606, %v1139
        %v1208 = vsub.f32 %v520, %v1142
        %v1209 = vsub.f32 %v609, %v1142
        %v1210 = vsub.f32 %v522, %v1145
        %v1211 = vsub.f32 %v611, %v1145
        %v1212 = vsub.f32 %v525, %v1148
        %v1213 = vsub.f32 %v614, %v1148
        %v1214 = vsub.f32 %v527, %v1151
        %v1215 = vsub.f32 %v616, %v1151
        %v1216 = vmul.f32 %v1152, 1.442695
        %v1217 = vpow.pop %v1216
        %v1218 = vmul.f32 %v1153, 1.442695
        %v1219 = vpow.pop %v1218
        %v1220 = vmul.f32 %v1154, 1.442695
        %v1221 = vpow.pop %v1220
        %v1222 = vmul.f32 %v1155, 1.442695
        %v1223 = vpow.pop %v1222
        %v1224 = vmul.f32 %v1156, 1.442695
        %v1225 = vpow.pop %v1224
        %v1226 = vmul.f32 %v1157, 1.442695
        %v1227 = vpow.pop %v1226
        %v1228 = vmul.f32 %v1158, 1.442695
        %v1229 = vpow.pop %v1228
        %v1230 = vmul.f32 %v1159, 1.442695
        %v1231 = vpow.pop %v1230
        %v1232 = vmul.f32 %v1160, 1.442695
        %v1233 = vpow.pop %v1232
        %v1234 = vmul.f32 %v1161, 1.442695
        %v1235 = vpow.pop %v1234
        %v1236 = vmul.f32 %v1162, 1.442695
        %v1237 = vpow.pop %v1236
        %v1238 = vmul.f32 %v1163, 1.442695
        %v1239 = vpow.pop %v1238
        %v1240 = vmul.f32 %v1164, 1.442695
        %v1241 = vpow.pop %v1240
        %v1242 = vmul.f32 %v1165, 1.442695
        %v1243 = vpow.pop %v1242
        %v1244 = vmul.f32 %v1166, 1.442695
        %v1245 = vpow.pop %v1244
        %v1246 = vmul.f32 %v1167, 1.442695
        %v1247 = vpow.pop %v1246
        %v1248 = vmul.f32 %v1168, 1.442695
        %v1249 = vpow.pop %v1248
        %v1250 = vmul.f32 %v1169, 1.442695
        %v1251 = vpow.pop %v1250
        %v1252 = vmul.f32 %v1170, 1.442695
        %v1253 = vpow.pop %v1252
        %v1254 = vmul.f32 %v1171, 1.442695
        %v1255 = vpow.pop %v1254
        %v1256 = vmul.f32 %v1172, 1.442695
        %v1257 = vpow.pop %v1256
        %v1258 = vmul.f32 %v1173, 1.442695
        %v1259 = vpow.pop %v1258
        %v1260 = vmul.f32 %v1174, 1.442695
        %v1261 = vpow.pop %v1260
        %v1262 = vmul.f32 %v1175, 1.442695
        %v1263 = vpow.pop %v1262
        %v1264 = vmul.f32 %v1176, 1.442695
        %v1265 = vpow.pop %v1264
        %v1266 = vmul.f32 %v1177, 1.442695
        %v1267 = vpow.pop %v1266
        %v1268 = vmul.f32 %v1178, 1.442695
        %v1269 = vpow.pop %v1268
        %v1270 = vmul.f32 %v1179, 1.442695
        %v1271 = vpow.pop %v1270
        %v1272 = vmul.f32 %v1180, 1.442695
        %v1273 = vpow.pop %v1272
        %v1274 = vmul.f32 %v1181, 1.442695
        %v1275 = vpow.pop %v1274
        %v1276 = vmul.f32 %v1182, 1.442695
        %v1277 = vpow.pop %v1276
        %v1278 = vmul.f32 %v1183, 1.442695
        %v1279 = vpow.pop %v1278
        %v1280 = vmul.f32 %v1184, 1.442695
        %v1281 = vpow.pop %v1280
        %v1282 = vmul.f32 %v1185, 1.442695
        %v1283 = vpow.pop %v1282
        %v1284 = vmul.f32 %v1186, 1.442695
        %v1285 = vpow.pop %v1284
        %v1286 = vmul.f32 %v1187, 1.442695
        %v1287 = vpow.pop %v1286
        %v1288 = vmul.f32 %v1188, 1.442695
        %v1289 = vpow.pop %v1288
        %v1290 = vmul.f32 %v1189, 1.442695
        %v1291 = vpow.pop %v1290
        %v1292 = vmul.f32 %v1190, 1.442695
        %v1293 = vpow.pop %v1292
        %v1294 = vmul.f32 %v1191, 1.442695
        %v1295 = vpow.pop %v1294
        %v1296 = vmul.f32 %v1192, 1.442695
        %v1297 = vpow.pop %v1296
        %v1298 = vmul.f32 %v1193, 1.442695
        %v1299 = vpow.pop %v1298
        %v1300 = vmul.f32 %v1194, 1.442695
        %v1301 = vpow.pop %v1300
        %v1302 = vmul.f32 %v1195, 1.442695
        %v1303 = vpow.pop %v1302
        %v1304 = vmul.f32 %v1196, 1.442695
        %v1305 = vpow.pop %v1304
        %v1306 = vmul.f32 %v1197, 1.442695
        %v1307 = vpow.pop %v1306
        %v1308 = vmul.f32 %v1198, 1.442695
        %v1309 = vpow.pop %v1308
        %v1310 = vmul.f32 %v1199, 1.442695
        %v1311 = vpow.pop %v1310
        %v1312 = vmul.f32 %v1200, 1.442695
        %v1313 = vpow.pop %v1312
        %v1314 = vmul.f32 %v1201, 1.442695
        %v1315 = vpow.pop %v1314
        %v1316 = vmul.f32 %v1202, 1.442695
        %v1317 = vpow.pop %v1316
        %v1318 = vmul.f32 %v1203, 1.442695
        %v1319 = vpow.pop %v1318
        %v1320 = vmul.f32 %v1204, 1.442695
        %v1321 = vpow.pop %v1320
        %v1322 = vmul.f32 %v1205, 1.442695
        %v1323 = vpow.pop %v1322
        %v1324 = vmul.f32 %v1206, 1.442695
        %v1325 = vpow.pop %v1324
        %v1326 = vmul.f32 %v1207, 1.442695
        %v1327 = vpow.pop %v1326
        %v1328 = vmul.f32 %v1208, 1.442695
        %v1329 = vpow.pop %v1328
        %v1330 = vmul.f32 %v1209, 1.442695
        %v1331 = vpow.pop %v1330
        %v1332 = vmul.f32 %v1210, 1.442695
        %v1333 = vpow.pop %v1332
        %v1334 = vmul.f32 %v1211, 1.442695
        %v1335 = vpow.pop %v1334
        %v1336 = vmul.f32 %v1212, 1.442695
        %v1337 = vpow.pop %v1336
        %v1338 = vmul.f32 %v1213, 1.442695
        %v1339 = vpow.pop %v1338
        %v1340 = vmul.f32 %v1214, 1.442695
        %v1341 = vpow.pop %v1340
        %v1342 = vmul.f32 %v1215, 1.442695
        %v1343 = vpow.pop %v1342
        %v1344 = vadd.f32 %v1217, %v1219
        %1345 = vadd.xlane.f32.xlu0 %v1344
        %v1346 = vpop.xlane.xlu0 %1345
        %v1347 = vadd.f32 %v1221, %v1223
        %1348 = vadd.xlane.f32.xlu0 %v1347
        %v1349 = vpop.xlane.xlu0 %1348
        %v1350 = vadd.f32 %v1225, %v1227
        %1351 = vadd.xlane.f32.xlu0 %v1350
        %v1352 = vpop.xlane.xlu0 %1351
        %v1353 = vadd.f32 %v1229, %v1231
        %1354 = vadd.xlane.f32.xlu0 %v1353
        %v1355 = vpop.xlane.xlu0 %1354
        %v1356 = vadd.f32 %v1233, %v1235
        %1357 = vadd.xlane.f32.xlu0 %v1356
        %v1358 = vpop.xlane.xlu0 %1357
        %v1359 = vadd.f32 %v1237, %v1239
        %1360 = vadd.xlane.f32.xlu0 %v1359
        %v1361 = vpop.xlane.xlu0 %1360
        %v1362 = vadd.f32 %v1241, %v1243
        %1363 = vadd.xlane.f32.xlu0 %v1362
        %v1364 = vpop.xlane.xlu0 %1363
        %v1365 = vadd.f32 %v1245, %v1247
        %1366 = vadd.xlane.f32.xlu0 %v1365
        %v1367 = vpop.xlane.xlu0 %1366
        %v1368 = vadd.f32 %v1249, %v1251
        %1369 = vadd.xlane.f32.xlu0 %v1368
        %v1370 = vpop.xlane.xlu0 %1369
        %v1371 = vadd.f32 %v1253, %v1255
        %1372 = vadd.xlane.f32.xlu0 %v1371
        %v1373 = vpop.xlane.xlu0 %1372
        %v1374 = vadd.f32 %v1257, %v1259
        %1375 = vadd.xlane.f32.xlu0 %v1374
        %v1376 = vpop.xlane.xlu0 %1375
        %v1377 = vadd.f32 %v1261, %v1263
        %1378 = vadd.xlane.f32.xlu0 %v1377
        %v1379 = vpop.xlane.xlu0 %1378
        %v1380 = vadd.f32 %v1265, %v1267
        %1381 = vadd.xlane.f32.xlu0 %v1380
        %v1382 = vpop.xlane.xlu0 %1381
        %v1383 = vadd.f32 %v1269, %v1271
        %1384 = vadd.xlane.f32.xlu0 %v1383
        %v1385 = vpop.xlane.xlu0 %1384
        %v1386 = vadd.f32 %v1273, %v1275
        %1387 = vadd.xlane.f32.xlu0 %v1386
        %v1388 = vpop.xlane.xlu0 %1387
        %v1389 = vadd.f32 %v1277, %v1279
        %1390 = vadd.xlane.f32.xlu0 %v1389
        %v1391 = vpop.xlane.xlu0 %1390
        %v1392 = vadd.f32 %v1281, %v1283
        %1393 = vadd.xlane.f32.xlu0 %v1392
        %v1394 = vpop.xlane.xlu0 %1393
        %v1395 = vadd.f32 %v1285, %v1287
        %1396 = vadd.xlane.f32.xlu0 %v1395
        %v1397 = vpop.xlane.xlu0 %1396
        %v1398 = vadd.f32 %v1289, %v1291
        %1399 = vadd.xlane.f32.xlu0 %v1398
        %v1400 = vpop.xlane.xlu0 %1399
        %v1401 = vadd.f32 %v1293, %v1295
        %1402 = vadd.xlane.f32.xlu0 %v1401
        %v1403 = vpop.xlane.xlu0 %1402
        %v1404 = vadd.f32 %v1297, %v1299
        %1405 = vadd.xlane.f32.xlu0 %v1404
        %v1406 = vpop.xlane.xlu0 %1405
        %v1407 = vadd.f32 %v1301, %v1303
        %1408 = vadd.xlane.f32.xlu0 %v1407
        %v1409 = vpop.xlane.xlu0 %1408
        %v1410 = vadd.f32 %v1305, %v1307
        %1411 = vadd.xlane.f32.xlu0 %v1410
        %v1412 = vpop.xlane.xlu0 %1411
        %v1413 = vadd.f32 %v1309, %v1311
        %1414 = vadd.xlane.f32.xlu0 %v1413
        %v1415 = vpop.xlane.xlu0 %1414
        %v1416 = vadd.f32 %v1313, %v1315
        %1417 = vadd.xlane.f32.xlu0 %v1416
        %v1418 = vpop.xlane.xlu0 %1417
        %v1419 = vadd.f32 %v1317, %v1319
        %1420 = vadd.xlane.f32.xlu0 %v1419
        %v1421 = vpop.xlane.xlu0 %1420
        %v1422 = vadd.f32 %v1321, %v1323
        %1423 = vadd.xlane.f32.xlu0 %v1422
        %v1424 = vpop.xlane.xlu0 %1423
        %v1425 = vadd.f32 %v1325, %v1327
        %1426 = vadd.xlane.f32.xlu0 %v1425
        %v1427 = vpop.xlane.xlu0 %1426
        %v1428 = vadd.f32 %v1329, %v1331
        %1429 = vadd.xlane.f32.xlu0 %v1428
        %v1430 = vpop.xlane.xlu0 %1429
        %v1431 = vadd.f32 %v1333, %v1335
        %1432 = vadd.xlane.f32.xlu0 %v1431
        %v1433 = vpop.xlane.xlu0 %1432
        %v1434 = vadd.f32 %v1337, %v1339
        %1435 = vadd.xlane.f32.xlu0 %v1434
        %v1436 = vpop.xlane.xlu0 %1435
        %v1437 = vadd.f32 %v1341, %v1343
        %1438 = vadd.xlane.f32.xlu0 %v1437
        %v1439 = vpop.xlane.xlu0 %1438
        %v1440 = vrcp.pop %v1346
        %v1441 = vrcp.pop %v1349
        %v1442 = vrcp.pop %v1352
        %v1443 = vrcp.pop %v1355
        %v1444 = vrcp.pop %v1358
        %v1445 = vrcp.pop %v1361
        %v1446 = vrcp.pop %v1364
        %v1447 = vrcp.pop %v1367
        %v1448 = vrcp.pop %v1370
        %v1449 = vrcp.pop %v1373
        %v1450 = vrcp.pop %v1376
        %v1451 = vrcp.pop %v1379
        %v1452 = vrcp.pop %v1382
        %v1453 = vrcp.pop %v1385
        %v1454 = vrcp.pop %v1388
        %v1455 = vrcp.pop %v1391
        %v1456 = vrcp.pop %v1394
        %v1457 = vrcp.pop %v1397
        %v1458 = vrcp.pop %v1400
        %v1459 = vrcp.pop %v1403
        %v1460 = vrcp.pop %v1406
        %v1461 = vrcp.pop %v1409
        %v1462 = vrcp.pop %v1412
        %v1463 = vrcp.pop %v1415
        %v1464 = vrcp.pop %v1418
        %v1465 = vrcp.pop %v1421
        %v1466 = vrcp.pop %v1424
        %v1467 = vrcp.pop %v1427
        %v1468 = vrcp.pop %v1430
        %v1469 = vrcp.pop %v1433
        %v1470 = vrcp.pop %v1436
        %v1471 = vrcp.pop %v1439
        %v1472 = vmul.f32 %v1217, %v1440
        %v1473 = vmul.f32 %v1219, %v1440
        %v1474 = vmul.f32 %v1221, %v1441
        %v1475 = vmul.f32 %v1223, %v1441
        %v1476 = vmul.f32 %v1225, %v1442
        %v1477 = vmul.f32 %v1227, %v1442
        %v1478 = vmul.f32 %v1229, %v1443
        %v1479 = vmul.f32 %v1231, %v1443
        %v1480 = vmul.f32 %v1233, %v1444
        %v1481 = vmul.f32 %v1235, %v1444
        %v1482 = vmul.f32 %v1237, %v1445
        %v1483 = vmul.f32 %v1239, %v1445
        %v1484 = vmul.f32 %v1241, %v1446
        %v1485 = vmul.f32 %v1243, %v1446
        %v1486 = vmul.f32 %v1245, %v1447
        %v1487 = vmul.f32 %v1247, %v1447
        %v1488 = vmul.f32 %v1249, %v1448
        %v1489 = vmul.f32 %v1251, %v1448
        %v1490 = vmul.f32 %v1253, %v1449
        %v1491 = vmul.f32 %v1255, %v1449
        %v1492 = vmul.f32 %v1257, %v1450
        %v1493 = vmul.f32 %v1259, %v1450
        %v1494 = vmul.f32 %v1261, %v1451
        %v1495 = vmul.f32 %v1263, %v1451
        %v1496 = vmul.f32 %v1265, %v1452
        %v1497 = vmul.f32 %v1267, %v1452
        %v1498 = vmul.f32 %v1269, %v1453
        %v1499 = vmul.f32 %v1271, %v1453
        %v1500 = vmul.f32 %v1273, %v1454
        %v1501 = vmul.f32 %v1275, %v1454
        %v1502 = vmul.f32 %v1277, %v1455
        %v1503 = vmul.f32 %v1279, %v1455
        %v1504 = vmul.f32 %v1281, %v1456
        %v1505 = vmul.f32 %v1283, %v1456
        %v1506 = vmul.f32 %v1285, %v1457
        %v1507 = vmul.f32 %v1287, %v1457
        %v1508 = vmul.f32 %v1289, %v1458
        %v1509 = vmul.f32 %v1291, %v1458
        %v1510 = vmul.f32 %v1293, %v1459
        %v1511 = vmul.f32 %v1295, %v1459
        %v1512 = vmul.f32 %v1297, %v1460
        %v1513 = vmul.f32 %v1299, %v1460
        %v1514 = vmul.f32 %v1301, %v1461
        %v1515 = vmul.f32 %v1303, %v1461
        %v1516 = vmul.f32 %v1305, %v1462
        %v1517 = vmul.f32 %v1307, %v1462
        %v1518 = vmul.f32 %v1309, %v1463
        %v1519 = vmul.f32 %v1311, %v1463
        %v1520 = vmul.f32 %v1313, %v1464
        %v1521 = vmul.f32 %v1315, %v1464
        %v1522 = vmul.f32 %v1317, %v1465
        %v1523 = vmul.f32 %v1319, %v1465
        %v1524 = vmul.f32 %v1321, %v1466
        %v1525 = vmul.f32 %v1323, %v1466
        %v1526 = vmul.f32 %v1325, %v1467
        %v1527 = vmul.f32 %v1327, %v1467
        %v1528 = vmul.f32 %v1329, %v1468
        %v1529 = vmul.f32 %v1331, %v1468
        %v1530 = vmul.f32 %v1333, %v1469
        %v1531 = vmul.f32 %v1335, %v1469
        %v1532 = vmul.f32 %v1337, %v1470
        %v1533 = vmul.f32 %v1339, %v1470
        %v1534 = vmul.f32 %v1341, %v1471
        %v1535 = vmul.f32 %v1343, %v1471
        %1536 = vst [vmem:[%s254] sm:$0xff] %v1472
        %1537 = vst [vmem:[%s254 + $0x8] sm:$0xff] %v1473
        %1538 = vst [vmem:[%s254 + $0x10] sm:$0xff] %v1474
        %1539 = vst [vmem:[%s254 + $0x18] sm:$0xff] %v1475
        %1540 = vst [vmem:[%s254 + $0x20] sm:$0xff] %v1476
        %1541 = vst [vmem:[%s254 + $0x28] sm:$0xff] %v1477
        %1542 = vst [vmem:[%s254 + $0x30] sm:$0xff] %v1478
        %1543 = vst [vmem:[%s254 + $0x38] sm:$0xff] %v1479
        %1544 = vst [vmem:[%s254 + $0x40] sm:$0xff] %v1480
        %1545 = vst [vmem:[%s254 + $0x48] sm:$0xff] %v1481
        %1546 = vst [vmem:[%s254 + $0x50] sm:$0xff] %v1482
        %1547 = vst [vmem:[%s254 + $0x58] sm:$0xff] %v1483
        %1548 = vst [vmem:[%s254 + $0x60] sm:$0xff] %v1484
        %1549 = vst [vmem:[%s254 + $0x68] sm:$0xff] %v1485
        %1550 = vst [vmem:[%s254 + $0x70] sm:$0xff] %v1486
        %1551 = vst [vmem:[%s254 + $0x78] sm:$0xff] %v1487
        %1552 = vst [vmem:[%s254 + $0x80] sm:$0xff] %v1488
        %1553 = vst [vmem:[%s254 + $0x88] sm:$0xff] %v1489
        %1554 = vst [vmem:[%s254 + $0x90] sm:$0xff] %v1490
        %1555 = vst [vmem:[%s254 + $0x98] sm:$0xff] %v1491
        %1556 = vst [vmem:[%s254 + $0xa0] sm:$0xff] %v1492
        %1557 = vst [vmem:[%s254 + $0xa8] sm:$0xff] %v1493
        %1558 = vst [vmem:[%s254 + $0xb0] sm:$0xff] %v1494
        %1559 = vst [vmem:[%s254 + $0xb8] sm:$0xff] %v1495
        %1560 = vst [vmem:[%s254 + $0xc0] sm:$0xff] %v1496
        %1561 = vst [vmem:[%s254 + $0xc8] sm:$0xff] %v1497
        %1562 = vst [vmem:[%s254 + $0xd0] sm:$0xff] %v1498
        %1563 = vst [vmem:[%s254 + $0xd8] sm:$0xff] %v1499
        %1564 = vst [vmem:[%s254 + $0xe0] sm:$0xff] %v1500
        %1565 = vst [vmem:[%s254 + $0xe8] sm:$0xff] %v1501
        %1566 = vst [vmem:[%s254 + $0xf0] sm:$0xff] %v1502
        %1567 = vst [vmem:[%s254 + $0xf8] sm:$0xff] %v1503
        %1568 = vst [vmem:[%s254 + $0x100] sm:$0xff] %v1504
        %1569 = vst [vmem:[%s254 + $0x108] sm:$0xff] %v1505
        %1570 = vst [vmem:[%s254 + $0x110] sm:$0xff] %v1506
        %1571 = vst [vmem:[%s254 + $0x118] sm:$0xff] %v1507
        %1572 = vst [vmem:[%s254 + $0x120] sm:$0xff] %v1508
        %1573 = vst [vmem:[%s254 + $0x128] sm:$0xff] %v1509
        %1574 = vst [vmem:[%s254 + $0x130] sm:$0xff] %v1510
        %1575 = vst [vmem:[%s254 + $0x138] sm:$0xff] %v1511
        %1576 = vst [vmem:[%s254 + $0x140] sm:$0xff] %v1512
        %1577 = vst [vmem:[%s254 + $0x148] sm:$0xff] %v1513
        %1578 = vst [vmem:[%s254 + $0x150] sm:$0xff] %v1514
        %1579 = vst [vmem:[%s254 + $0x158] sm:$0xff] %v1515
        %1580 = vst [vmem:[%s254 + $0x160] sm:$0xff] %v1516
        %1581 = vst [vmem:[%s254 + $0x168] sm:$0xff] %v1517
        %1582 = vst [vmem:[%s254 + $0x170] sm:$0xff] %v1518
        %1583 = vst [vmem:[%s254 + $0x178] sm:$0xff] %v1519
        %1584 = vst [vmem:[%s254 + $0x180] sm:$0xff] %v1520
        %1585 = vst [vmem:[%s254 + $0x188] sm:$0xff] %v1521
        %1586 = vst [vmem:[%s254 + $0x190] sm:$0xff] %v1522
        %1587 = vst [vmem:[%s254 + $0x198] sm:$0xff] %v1523
        %1588 = vst [vmem:[%s254 + $0x1a0] sm:$0xff] %v1524
        %1589 = vst [vmem:[%s254 + $0x1a8] sm:$0xff] %v1525
        %1590 = vst [vmem:[%s254 + $0x1b0] sm:$0xff] %v1526
        %1591 = vst [vmem:[%s254 + $0x1b8] sm:$0xff] %v1527
        %1592 = vst [vmem:[%s254 + $0x1c0] sm:$0xff] %v1528
        %1593 = vst [vmem:[%s254 + $0x1c8] sm:$0xff] %v1529
        %1594 = vst [vmem:[%s254 + $0x1d0] sm:$0xff] %v1530
        %1595 = vst [vmem:[%s254 + $0x1d8] sm:$0xff] %v1531
        %1596 = vst [vmem:[%s254 + $0x1e0] sm:$0xff] %v1532
        %1597 = vst [vmem:[%s254 + $0x1e8] sm:$0xff] %v1533
        %1598 = vst [vmem:[%s254 + $0x1f0] sm:$0xff] %v1534
        %1599 = vst [vmem:[%s254 + $0x1f8] sm:$0xff] %v1535
        %1600 = vmatpush.bf16.msra.mxu0 %v1038
        %1601 = vmatpush.bf16.msra.mxu0 %v1036
        %1602 = vmatpush.bf16.msra.mxu0 %v1034
        %1603 = vmatpush.bf16.msra.mxu0 %v1032
        %1604 = vmatpush.bf16.msra.mxu0 %v1030
        %1605 = vmatpush.bf16.msra.mxu0 %v1028
        %1606 = vmatpush.bf16.msra.mxu0 %v1026
        %1607 = vmatpush.bf16.msra.mxu0 %v1024
        %1608 = vmatmul.bf16.gmra.mxu0 %v259
        %v1609 = vpop.f32.mrf.mxu0
        %v1610 = vadd.f32 0.0, %v1609
        %v1611 = vpop.f32.mrf.mxu0
        %1612 = vdwg.mxu0
        %1613 = vmatpush.bf16.msra.mxu0 %v1054
        %1614 = vmatpush.bf16.msra.mxu0 %v1052
        %1615 = vmatpush.bf16.msra.mxu0 %v1050
        %1616 = vmatpush.bf16.msra.mxu0 %v1048
        %1617 = vmatpush.bf16.msra.mxu0 %v1046
        %1618 = vmatpush.bf16.msra.mxu0 %v1044
        %1619 = vmatpush.bf16.msra.mxu0 %v1042
        %1620 = vmatpush.bf16.msra.mxu0 %v1040
        %1621 = vmatmul.bf16.gmra.mxu0 %v260
        %v1622 = vpop.f32.mrf.mxu0
        %v1623 = vadd.f32 %v1610, %v1622
        %v1624 = vpop.f32.mrf.mxu0
        %1625 = vdwg.mxu0
        %1626 = vmatpush.bf16.msra.mxu0 %v1039
        %1627 = vmatpush.bf16.msra.mxu0 %v1037
        %1628 = vmatpush.bf16.msra.mxu0 %v1035
        %1629 = vmatpush.bf16.msra.mxu0 %v1033
        %1630 = vmatpush.bf16.msra.mxu0 %v1031
        %1631 = vmatpush.bf16.msra.mxu0 %v1029
        %1632 = vmatpush.bf16.msra.mxu0 %v1027
        %1633 = vmatpush.bf16.msra.mxu0 %v1025
        %1634 = vmatmul.bf16.gmra.mxu0 %v259
        %v1635 = vpop.f32.mrf.mxu0
        %v1636 = vadd.f32 0.0, %v1635
        %v1637 = vpop.f32.mrf.mxu0
        %1638 = vdwg.mxu0
        %1639 = vmatpush.bf16.msra.mxu0 %v1055
        %1640 = vmatpush.bf16.msra.mxu0 %v1053
        %1641 = vmatpush.bf16.msra.mxu0 %v1051
        %1642 = vmatpush.bf16.msra.mxu0 %v1049
        %1643 = vmatpush.bf16.msra.mxu0 %v1047
        %1644 = vmatpush.bf16.msra.mxu0 %v1045
        %1645 = vmatpush.bf16.msra.mxu0 %v1043
        %1646 = vmatpush.bf16.msra.mxu0 %v1041
        %1647 = vmatmul.bf16.gmra.mxu0 %v260
        %v1648 = vpop.f32.mrf.mxu0
        %v1649 = vadd.f32 %v1636, %v1648
        %v1650 = vpop.f32.mrf.mxu0
        %1651 = vdwg.mxu0
        %s1652 = sld [smem:[#allocation2]]
        %v1653 = vstv %s1652
        %v1654 = vmul.f32 %v1653, %v1623
        %v1655 = vmul.f32 %v1653, %v1649
        %v1656 = vadd.f32 %v1654, %v256
        %v1657 = vadd.f32 %v1655, %v257
        %1658 = vst [vmem:[%s247] sm:$0xff] %v1656
        %1659 = vst [vmem:[%s247 + $0x8] sm:$0xff] %v1657
        %s1660 = sand.u32 %s124, 1
        %s1661 = scalar_lea.sflag [#allocation5], %s1660
        %s1662 = sand.u32 %s124, 1
        %s1663 = smul.addr %s1662, 16
        %s1664 = scalar_lea.vmem [#allocation6], %s1663
        %s1665 = sand.u32 %s150, 1
        %s1666 = scalar_lea.sflag [#allocation8], %s1665
        %s1667 = sand.u32 %s150, 1
        %s1668 = smul.addr %s1667, 512
        %s1669 = scalar_lea.vmem [#allocation7], %s1668
        // Predicated region
        $region41: #{tpu_custom_call.1} parent=35 // pred_check
          %p1670 = pneg %p134
        $region42: #{tpu_custom_call.1} parent=35 // pred_check_branch
          %1672 = sbr.rel (%p1670) target = $region44
        $region43: #{tpu_custom_call.1} parent=35 // pred_region
          %1674 = vsyncadd %s1661, 0
          %s1675 = smul.addr %s27, 2
          %s1676 = smul.addr %s1675, 8
          %s1677 = scalar_lea.hbm %s4, %s1676
          %s1679 = sshll.u32 %s1664, 4
          %s1680 = int_to_ptr.vmem [resolvable:$true] %s1679
          %s1681 = sshll.u32 %s1677, 4
          %s1682 = int_to_ptr.hbm [resolvable:$true] %s1681
          %1684 = dma.vmem_to_hbm [thread:$0]  %s1680, 256, %s1682, %s1661
        $region44: #{tpu_custom_call.1} parent=35 // pred_fallthru
          _
        // Predicated region
        $region45: #{tpu_custom_call.1} parent=35 // pred_check
          %p1685 = pneg %p160
        $region46: #{tpu_custom_call.1} parent=35 // pred_check_branch
          %1687 = sbr.rel (%p1685) target = $region48
        $region47: #{tpu_custom_call.1} parent=35 // pred_region
          %1689 = vsyncadd %s1666, 0
          %s1690 = smul.addr %s27, 64
          %s1691 = smul.addr %s1690, 8
          %s1692 = scalar_lea.hbm %s5, %s1691
          %s1693 = sshll.u32 %s1669, 4
          %s1694 = int_to_ptr.vmem [resolvable:$true] %s1693
          %s1695 = sshll.u32 %s1692, 4
          %s1696 = int_to_ptr.hbm [resolvable:$true] %s1695
          %1701 = dma.vmem_to_hbm [thread:$0]  %s1694, 8192, %s1696, %s1666, 256, 256, 16
        $region48: #{tpu_custom_call.1} parent=35 // pred_fallthru
          _
      $region36: #{tpu_custom_call.1} parent=5 // pred_fallthru
        _
      %p1702 = scmp.le.s32.totalorder 2, %s22
      // Predicated region
      $region49: #{tpu_custom_call.1} parent=5 // pred_check
        %p1703 = pneg %p1702
      $region50: #{tpu_custom_call.1} parent=5 // pred_check_branch
        %1705 = sbr.rel (%p1703) target = $region52
      $region51: #{tpu_custom_call.1} parent=5 // pred_region
        %s1706 = ssub.s32 %s22, 2
        // Predicated region
        $region53: #{tpu_custom_call.1} parent=51 // pred_check
          %p1707 = pneg %p140
        $region54: #{tpu_custom_call.1} parent=51 // pred_check_branch
          %1709 = sbr.rel (%p1707) target = $region56
        $region55: #{tpu_custom_call.1} parent=51 // pred_region
          %s1710 = sand.u32 %s125, 1
          %s1711 = scalar_lea.sflag [#allocation5], %s1710
          %s1712 = sand.u32 %s125, 1
          %s1713 = smul.addr %s1712, 16
          %s1714 = scalar_lea.vmem [#allocation6], %s1713
          %1716 = dma.done %s1711, 256
        $region56: #{tpu_custom_call.1} parent=51 // pred_fallthru
          _
        // Predicated region
        $region57: #{tpu_custom_call.1} parent=51 // pred_check
          %p1717 = pneg %p166
        $region58: #{tpu_custom_call.1} parent=51 // pred_check_branch
          %1719 = sbr.rel (%p1717) target = $region60
        $region59: #{tpu_custom_call.1} parent=51 // pred_region
          %s1720 = sand.u32 %s151, 1
          %s1721 = scalar_lea.sflag [#allocation8], %s1720
          %s1722 = sand.u32 %s151, 1
          %s1723 = smul.addr %s1722, 512
          %s1724 = scalar_lea.vmem [#allocation7], %s1723
          %1726 = dma.done %s1721, 8192
        $region60: #{tpu_custom_call.1} parent=51 // pred_fallthru
          _
      $region52: #{tpu_custom_call.1} parent=5 // pred_fallthru
        _
    $region6: #{tpu_custom_call.1} parent=1 // loop_footer
      %s26 = sadd.s32 1, %s22
    $region7: #{tpu_custom_call.1} parent=1 // loop_footer_branch
      %21 = sbr.rel target = $region3
    $region8: #{tpu_custom_call.1} parent=1 // loop_exit
      _
    %1727 = vsyncpa [#allocation4], 1
    %s1728 = scalar_lea.sflag [#allocation4], 1
    %1729 = vsyncpa %s1728, 1
    %1730 = vsyncpa [#allocation5], 1
    %s1731 = scalar_lea.sflag [#allocation5], 1
    %1732 = vsyncpa %s1731, 1
    %1733 = vsyncpa [#allocation8], 1
    %s1734 = scalar_lea.sflag [#allocation8], 1
    %1735 = vsyncpa %s1734, 1

</llo_original>
